<compile_context>
chip_gen: v7x
topology: tpu7x:2x2x1
jax: 0.10.0
libtpu: 0.0.40
codegen_flags: <defaults>
</compile_context>

<pallas_src>
import functools

import jax
import jax.numpy as jnp
from jax import lax
from jax.experimental import pallas as pl
from jax.experimental.pallas import tpu as pltpu


_LN_EPS = 1e-5  # PyTorch nn.LayerNorm default


def _gelu_tanh(x):
    # TODO(synk): PyTorch nn.GELU() defaults to the exact erf form; the tanh
    # approximation (max abs deviation ~3e-4) is used so every op is a
    # guaranteed Mosaic lowering.  The pure-JAX reference uses the same form.
    c = 0.7978845608028654  # sqrt(2/pi)
    return 0.5 * x * (1.0 + jnp.tanh(c * (x + 0.044715 * x * x * x)))


def _row_tile(m, max_tile=512):
    """Largest multiple-of-8 divisor of m that is <= max_tile; falls back to a
    single full-extent block (always legal) when m is not a multiple of 8.
    Lane dims are always full-extent in these kernels, so only the sublane
    (row) dim needs the divisible-by-8 rule."""
    if m % 8 != 0:
        # TODO(synk): pad rows on the host for ragged M instead of one block.
        return m
    for t in range(min(max_tile, m), 7, -8):
        if m % t == 0:
            return t
    return m


def _compiler_params(est_bytes, semantics):
    limit = max(32 << 20, min(int(est_bytes * 1.5), 100 << 20))
    return pltpu.CompilerParams(dimension_semantics=semantics,
                                vmem_limit_bytes=limit)


# ---------------------------------------------------------------------------
# Attention (optionally fused with the preceding LayerNorm)
# ---------------------------------------------------------------------------
def _attention_kernel(x_ref, g_ref, b_ref, wq_ref, wk_ref, wv_ref, wp_ref,
                      bp_ref, o_ref, stage_ref, *, num_heads, head_dim,
                      apply_ln, ln_eps, compute_dtype):
    x = x_ref[0]                                   # (N, C)
    if apply_ln:
        xf = x.astype(jnp.float32)
        mean = jnp.mean(xf, axis=-1, keepdims=True)
        xc = xf - mean
        var = jnp.mean(xc * xc, axis=-1, keepdims=True)   # biased, as PyTorch
        xn = xc * lax.rsqrt(var + ln_eps) * g_ref[...] + b_ref[...]
        xcmp = xn.astype(compute_dtype)
    else:
        xcmp = x.astype(compute_dtype)

    # Wide QKV projections (K = C -> full MXU width); scale folded into Wq.
    q = jnp.dot(xcmp, wq_ref[...], preferred_element_type=compute_dtype)  # (N, AH)
    k = jnp.dot(xcmp, wk_ref[...], preferred_element_type=compute_dtype)
    v = jnp.dot(xcmp, wv_ref[...], preferred_element_type=compute_dtype)

    # Static (unrolled) per-head loop; heads are staged into a (N, AH) scratch.
    for h in range(num_heads):
        lo = h * head_dim
        hi = lo + head_dim
        qh = q[:, lo:hi]
        kh = k[:, lo:hi]
        vh = v[:, lo:hi]
        # Scores: contract last dims of both operands (no materialized k.T).
        s = lax.dot_general(qh, kh, (((1,), (1,)), ((), ())),
                            preferred_element_type=jnp.float32)      # (N, N)
        s = s - jnp.max(s, axis=-1, keepdims=True)
        e = jnp.exp(s)                                               # f32
        # TODO(synk): on v6e/v7x a bf16 exp roughly doubles EUP throughput.
        denom = jnp.sum(e, axis=-1, keepdims=True)                   # (N, 1)
        # attn_drop has p=0.0 -> identity.  Deferred softmax normalization:
        # scale the small (N, hd) result instead of the (N, N) matrix.
        oh = jnp.dot(e.astype(compute_dtype), vh,
                     preferred_element_type=jnp.float32)             # (N, hd)
        oh = oh * pl.reciprocal(denom, approx=True)
        stage_ref[:, lo:hi] = oh.astype(compute_dtype)

    # Single wide output projection (K = AH) + bias; proj_drop p=0.0 -> id.
    out = jnp.dot(stage_ref[...], wp_ref[...],
                  preferred_element_type=jnp.float32) + bp_ref[...]
    o_ref[0] = out.astype(o_ref.dtype)


def attention_forward(x, wq_t, wk_t, wv_t, wp_t, bp, ln_g, ln_b, *,
                      num_heads, apply_ln, compute_dtype=jnp.bfloat16,
                      out_dtype=None, ln_eps=_LN_EPS):
    """x: (B, N, C).  wq_t/wk_t/wv_t: (C, AH) pre-transposed (scale folded into
    wq_t), wp_t: (AH, C) pre-transposed, bp/ln_g/ln_b: (1, C) f32."""
    B, N, C = x.shape
    AH = wq_t.shape[1]
    head_dim = AH // num_heads
    out_dtype = x.dtype if out_dtype is None else out_dtype

    cds = jnp.dtype(compute_dtype).itemsize
    est = (2 * N * C * (x.dtype.itemsize + jnp.dtype(out_dtype).itemsize)
           + 2 * (3 * C * AH + AH * C) * cds         # weights (double buffered)
           + N * AH * cds                            # head staging scratch
           + 3 * N * AH * cds + 3 * N * N * 4        # q/k/v + score temporaries
           + 16 * C * 4)

    kernel = functools.partial(_attention_kernel, num_heads=num_heads,
                               head_dim=head_dim, apply_ln=apply_ln,
                               ln_eps=ln_eps, compute_dtype=compute_dtype)

    return pl.pallas_call(
        kernel,
        out_shape=jax.ShapeDtypeStruct((B, N, C), out_dtype),
        grid_spec=pltpu.PrefetchScalarGridSpec(
            num_scalar_prefetch=0,
            grid=(B,),
            in_specs=[
                pl.BlockSpec((1, N, C), lambda b: (b, 0, 0)),   # x
                pl.BlockSpec((1, C), lambda b: (0, 0)),         # ln gamma
                pl.BlockSpec((1, C), lambda b: (0, 0)),         # ln beta
                pl.BlockSpec((C, AH), lambda b: (0, 0)),        # Wq^T * scale
                pl.BlockSpec((C, AH), lambda b: (0, 0)),        # Wk^T
                pl.BlockSpec((C, AH), lambda b: (0, 0)),        # Wv^T
                pl.BlockSpec((AH, C), lambda b: (0, 0)),        # Wp^T
                pl.BlockSpec((1, C), lambda b: (0, 0)),         # bp
            ],
            out_specs=pl.BlockSpec((1, N, C), lambda b: (b, 0, 0)),
            scratch_shapes=[pltpu.VMEM((N, AH), compute_dtype)],
        ),
        compiler_params=_compiler_params(est, ("parallel",)),
    )(x, ln_g, ln_b, wq_t, wk_t, wv_t, wp_t, bp)


# ---------------------------------------------------------------------------
# Row-tiled fused kernels (LayerNorm / adapters / main MLP + residuals)
# ---------------------------------------------------------------------------
def _ln_adapter_kernel(x_ref, g_ref, b_ref, w1_ref, b1_ref, w2_ref, b2_ref,
                       o_ref, *, eps, compute_dtype):
    # out = xn + fc2(gelu(fc1(xn))),  xn = LayerNorm(x)   (Adapter skip=True)
    x = x_ref[...].astype(jnp.float32)
    mean = jnp.mean(x, axis=-1, keepdims=True)
    xc = x - mean
    var = jnp.mean(xc * xc, axis=-1, keepdims=True)
    xn = xc * lax.rsqrt(var + eps) * g_ref[...] + b_ref[...]
    xnc = xn.astype(compute_dtype)
    h = jnp.dot(xnc, w1_ref[...], preferred_element_type=jnp.float32) + b1_ref[...]
    h = _gelu_tanh(h)
    y = jnp.dot(h.astype(compute_dtype), w2_ref[...],
                preferred_element_type=jnp.float32) + b2_ref[...]
    o_ref[...] = (xn + y).astype(o_ref.dtype)


def _adapter_residual_kernel(a_ref, xprev_ref, w1_ref, b1_ref, w2_ref, b2_ref,
                             o_ref, *, skip, compute_dtype):
    # out = x_prev [+ a] + fc2(gelu(fc1(a)))  -- adapter fused with the outer
    # residual add of the block.
    a_cd = a_ref[...].astype(compute_dtype)
    h = jnp.dot(a_cd, w1_ref[...], preferred_element_type=jnp.float32) + b1_ref[...]
    h = _gelu_tanh(h)
    y = jnp.dot(h.astype(compute_dtype), w2_ref[...],
                preferred_element_type=jnp.float32) + b2_ref[...]
    out = xprev_ref[...].astype(jnp.float32) + y
    if skip:
        out = out + a_ref[...].astype(jnp.float32)
    o_ref[...] = out.astype(o_ref.dtype)


def _mlp_branch_kernel(x_ref, g_ref, b_ref, fc1w_ref, fc1b_ref, fc2w_ref,
                       fc2b_ref, m1w_ref, m1b_ref, m2w_ref, m2b_ref, o_ref,
                       *, eps, scale, compute_dtype):
    # out = x + fc2(gelu(fc1(xn))) + scale * m2(gelu(m1(xn))),  xn = LN2(x)
    x = x_ref[...].astype(jnp.float32)
    mean = jnp.mean(x, axis=-1, keepdims=True)
    xc = x - mean
    var = jnp.mean(xc * xc, axis=-1, keepdims=True)
    xn = xc * lax.rsqrt(var + eps) * g_ref[...] + b_ref[...]
    xnc = xn.astype(compute_dtype)
    # main MLP
    h = jnp.dot(xnc, fc1w_ref[...], preferred_element_type=jnp.float32) + fc1b_ref[...]
    h = _gelu_tanh(h)
    y_main = jnp.dot(h.astype(compute_dtype), fc2w_ref[...],
                     preferred_element_type=jnp.float32) + fc2b_ref[...]
    # MLP_Adapter (skip_connect=False)
    ha = jnp.dot(xnc, m1w_ref[...], preferred_element_type=jnp.float32) + m1b_ref[...]
    ha = _gelu_tanh(ha)
    y_ad = jnp.dot(ha.astype(compute_dtype), m2w_ref[...],
                   preferred_element_type=jnp.float32) + m2b_ref[...]
    o_ref[...] = (x + y_main + scale * y_ad).astype(o_ref.dtype)


def _row_tiled_call(kernel, row_inputs, const_inputs, out_dim, out_dtype):
    """Row-tiled pallas_call: row_inputs are (M, d_i) tiled over rows,
    const_inputs are small 2-D weights/biases replicated to every step."""
    M = row_inputs[0].shape[0]
    tm = _row_tile(M)
    row_specs = [pl.BlockSpec((tm, a.shape[-1]), lambda i: (i, 0))
                 for a in row_inputs]
    const_specs = [pl.BlockSpec(a.shape, lambda i: (0, 0))
                   for a in const_inputs]
    widths = ([out_dim] + [a.shape[-1] for a in row_inputs]
              + [a.shape[-1] for a in const_inputs])
    est = (sum(2 * tm * a.shape[-1] * a.dtype.itemsize for a in row_inputs)
           + sum(2 * a.size * a.dtype.itemsize for a in const_inputs)
           + 2 * tm * out_dim * jnp.dtype(out_dtype).itemsize
           + 8 * tm * max(widths) * 4)                 # f32 temporaries
    return pl.pallas_call(
        kernel,
        out_shape=jax.ShapeDtypeStruct((M, out_dim), out_dtype),
        grid_spec=pltpu.PrefetchScalarGridSpec(
            num_scalar_prefetch=0,
            grid=(M // tm,),
            in_specs=row_specs + const_specs,
            out_specs=pl.BlockSpec((tm, out_dim), lambda i: (i, 0)),
        ),
        compiler_params=_compiler_params(est, ("parallel",)),
    )(*row_inputs, *const_inputs)


# ---------------------------------------------------------------------------
# One-time (per block) host-side weight preparation
# ---------------------------------------------------------------------------
def prepare_aim_block_params(p, *, num_heads, compute_dtype=jnp.bfloat16):
    C = p["norm1_g"].shape[0]
    AH = p["wq"].shape[0]
    head_dim = AH // num_heads
    scale = head_dim ** (-0.5)
    cd = compute_dtype

    def wT(w):   # (out, in) -> (in, out), MXU compute dtype
        return jnp.asarray(w).T.astype(cd)

    def bias(b):  # (d,) -> (1, d) f32
        return jnp.asarray(b).reshape(1, -1).astype(jnp.float32)

    return dict(
        norm1_g=bias(p["norm1_g"]), norm1_b=bias(p["norm1_b"]),
        norm2_g=bias(p["norm2_g"]), norm2_b=bias(p["norm2_b"]),
        wq_t=(jnp.asarray(p["wq"]).T * scale).astype(cd),   # scale folded in
        wk_t=wT(p["wk"]), wv_t=wT(p["wv"]),
        wp_t=wT(p["wp"]), bp=bias(p["bp"]),
        fc1_w=wT(p["fc1_w"]), fc1_b=bias(p["fc1_b"]),
        fc2_w=wT(p["fc2_w"]), fc2_b=bias(p["fc2_b"]),
        tin_w1=wT(p["tin_w1"]), tin_b1=bias(p["tin_b1"]),
        tin_w2=wT(p["tin_w2"]), tin_b2=bias(p["tin_b2"]),
        t_w1=wT(p["t_w1"]), t_b1=bias(p["t_b1"]),
        t_w2=wT(p["t_w2"]), t_b2=bias(p["t_b2"]),
        s_w1=wT(p["s_w1"]), s_b1=bias(p["s_b1"]),
        s_w2=wT(p["s_w2"]), s_b2=bias(p["s_b2"]),
        m_w1=wT(p["m_w1"]), m_b1=bias(p["m_b1"]),
        m_w2=wT(p["m_w2"]), m_b2=bias(p["m_b2"]),
    )


# ---------------------------------------------------------------------------
# AIMBlock forward (6 fused pallas_calls, no XLA glue between them)
# ---------------------------------------------------------------------------
def aim_block_forward(x, p, *, num_heads, block_scale=1.0, num_tadapter=2,
                      compute_dtype=jnp.bfloat16):
    B, N, C = x.shape
    pp = prepare_aim_block_params(p, num_heads=num_heads,
                                  compute_dtype=compute_dtype)
    x2d = x.reshape(B * N, C)

    # Branch 1: x + T_Adapter(attn(T_Adapter_in(norm1(x))))   (drop_path = Id)
    if num_tadapter == 2:
        a_in2d = _row_tiled_call(
            functools.partial(_ln_adapter_kernel, eps=_LN_EPS,
                              compute_dtype=compute_dtype),
            [x2d],
            [pp["norm1_g"], pp["norm1_b"],
             pp["tin_w1"], pp["tin_b1"], pp["tin_w2"], pp["tin_b2"]],
            C, compute_dtype)                                   # bf16 producer
        a = attention_forward(a_in2d.reshape(B, N, C),
                              pp["wq_t"], pp["wk_t"], pp["wv_t"], pp["wp_t"],
                              pp["bp"], pp["norm1_g"], pp["norm1_b"],
                              num_heads=num_heads, apply_ln=False,
                              compute_dtype=compute_dtype, out_dtype=x.dtype)
    else:
        a = attention_forward(x, pp["wq_t"], pp["wk_t"], pp["wv_t"], pp["wp_t"],
                              pp["bp"], pp["norm1_g"], pp["norm1_b"],
                              num_heads=num_heads, apply_ln=True,
                              compute_dtype=compute_dtype, out_dtype=x.dtype)
    x2d = _row_tiled_call(
        functools.partial(_adapter_residual_kernel, skip=False,
                          compute_dtype=compute_dtype),
        [a.reshape(B * N, C), x2d],
        [pp["t_w1"], pp["t_b1"], pp["t_w2"], pp["t_b2"]],
        C, x.dtype)

    # Branch 2: x + S_Adapter(attn(norm1(x)))   (norm1 fused into attention)
    a2 = attention_forward(x2d.reshape(B, N, C),
                           pp["wq_t"], pp["wk_t"], pp["wv_t"], pp["wp_t"],
                           pp["bp"], pp["norm1_g"], pp["norm1_b"],
                           num_heads=num_heads, apply_ln=True,
                           compute_dtype=compute_dtype, out_dtype=x.dtype)
    x2d = _row_tiled_call(
        functools.partial(_adapter_residual_kernel, skip=True,
                          compute_dtype=compute_dtype),
        [a2.reshape(B * N, C), x2d],
        [pp["s_w1"], pp["s_b1"], pp["s_w2"], pp["s_b2"]],
        C, x.dtype)

    # MLP branch: x + fc2(gelu(fc1(norm2(x)))) + scale * MLP_Adapter(norm2(x))
    out2d = _row_tiled_call(
        functools.partial(_mlp_branch_kernel, eps=_LN_EPS,
                          scale=float(block_scale),
                          compute_dtype=compute_dtype),
        [x2d],
        [pp["norm2_g"], pp["norm2_b"],
         pp["fc1_w"], pp["fc1_b"], pp["fc2_w"], pp["fc2_b"],
         pp["m_w1"], pp["m_b1"], pp["m_w2"], pp["m_b2"]],
        C, x.dtype)
    return out2d.reshape(B, N, C)


# ---------------------------------------------------------------------------
# Pure-JAX references (mirror PyTorch forward exactly, tanh-GELU)
# ---------------------------------------------------------------------------
def attention_reference(x, wq, wk, wv, wp, bp, *, num_heads):
    B, N, C = x.shape
    AH = wq.shape[0]
    hd = AH // num_heads
    scale = hd ** (-0.5)
    q = (x @ wq.T) * scale
    k = x @ wk.T
    v = x @ wv.T

    def shp(t):
        return t.reshape(B, N, num_heads, hd).transpose(0, 2, 1, 3)

    q, k, v = shp(q), shp(k), shp(v)
    attn = jnp.einsum("bhnd,bhmd->bhnm", q, k)
    attn = jax.nn.softmax(attn, axis=-1)
    out = jnp.einsum("bhnm,bhmd->bhnd", attn, v)
    out = out.transpose(0, 2, 1, 3).reshape(B, N, AH)
    return out @ wp.T + bp


def layernorm_reference(x, g, b, eps=_LN_EPS):
    mean = jnp.mean(x, axis=-1, keepdims=True)
    xc = x - mean
    var = jnp.mean(xc * xc, axis=-1, keepdims=True)
    return xc * lax.rsqrt(var + eps) * g + b


def adapter_reference(x, w1, b1, w2, b2, *, residual):
    h = _gelu_tanh(x @ w1.T + b1)
    y = h @ w2.T + b2
    return x + y if residual else y


def aim_block_reference(x, p, *, num_heads, block_scale=1.0, num_tadapter=2):
    xn1 = layernorm_reference(x, p["norm1_g"], p["norm1_b"])
    if num_tadapter == 2:
        a_in = adapter_reference(xn1, p["tin_w1"], p["tin_b1"], p["tin_w2"],
                                 p["tin_b2"], residual=True)
    else:
        a_in = xn1
    a = attention_reference(a_in, p["wq"], p["wk"], p["wv"], p["wp"], p["bp"],
                            num_heads=num_heads)
    x = x + adapter_reference(a, p["t_w1"], p["t_b1"], p["t_w2"], p["t_b2"],
                              residual=False)
    xn1b = layernorm_reference(x, p["norm1_g"], p["norm1_b"])
    a2 = attention_reference(xn1b, p["wq"], p["wk"], p["wv"], p["wp"], p["bp"],
                             num_heads=num_heads)
    x = x + adapter_reference(a2, p["s_w1"], p["s_b1"], p["s_w2"], p["s_b2"],
                              residual=True)
    xn2 = layernorm_reference(x, p["norm2_g"], p["norm2_b"])
    x_mlp = adapter_reference(xn2, p["fc1_w"], p["fc1_b"], p["fc2_w"], p["fc2_b"],
                              residual=False)
    x_mlp_adapter = block_scale * adapter_reference(
        xn2, p["m_w1"], p["m_b1"], p["m_w2"], p["m_b2"], residual=False)
    return x + x_mlp + x_mlp_adapter


# ---------------------------------------------------------------------------
if __name__ == "__main__":
    # Small shapes consistent with the module: (B, N, C), dim divisible by heads.
    B, N, C = 2, 8, 32
    num_heads = 4
    head_dim = C // num_heads
    AH = head_dim * num_heads          # attn_head_dim=None -> AH == C
    dh = int(C * 0.25)                 # Adapter hidden
    mh = int(C * 4.0)                  # MLP hidden (mlp_ratio=4.0)

    keys = iter(jax.random.split(jax.random.PRNGKey(0), 40))

    def nrm(shape, s=0.05):
        return jax.random.normal(next(keys), shape, dtype=jnp.float32) * s

    params = dict(
        norm1_g=1.0 + nrm((C,), 0.02), norm1_b=nrm((C,), 0.02),
        norm2_g=1.0 + nrm((C,), 0.02), norm2_b=nrm((C,), 0.02),
        wq=nrm((AH, C)), wk=nrm((AH, C)), wv=nrm((AH, C)),
        wp=nrm((C, AH)), bp=nrm((C,), 0.01),
        fc1_w=nrm((mh, C)), fc1_b=nrm((mh,), 0.01),
        fc2_w=nrm((C, mh)), fc2_b=nrm((C,), 0.01),
        tin_w1=nrm((dh, C)), tin_b1=nrm((dh,), 0.01),
        tin_w2=nrm((C, dh)), tin_b2=nrm((C,), 0.01),
        t_w1=nrm((dh, C)), t_b1=nrm((dh,), 0.01),
        t_w2=nrm((C, dh)), t_b2=nrm((C,), 0.01),
        s_w1=nrm((dh, C)), s_b1=nrm((dh,), 0.01),
        s_w2=nrm((C, dh)), s_b2=nrm((C,), 0.01),
        m_w1=nrm((dh, C)), m_b1=nrm((dh,), 0.01),
        m_w2=nrm((C, dh)), m_b2=nrm((C,), 0.01),
    )
    x = jax.random.normal(next(keys), (B, N, C), dtype=jnp.float32)

    # 1) Attention kernel alone, f32 compute, no fused LN (tolerance covers the
    #    EUP approximate-reciprocal softmax normalization).
    scale = head_dim ** (-0.5)
    wq_t = (params["wq"].T * scale).astype(jnp.float32)
    wk_t = params["wk"].T.astype(jnp.float32)
    wv_t = params["wv"].T.astype(jnp.float32)
    wp_t = params["wp"].T.astype(jnp.float32)
    bp_r = params["bp"].reshape(1, C).astype(jnp.float32)
    g_r = params["norm1_g"].reshape(1, C).astype(jnp.float32)
    b_r = params["norm1_b"].reshape(1, C).astype(jnp.float32)
    y_attn = attention_forward(x, wq_t, wk_t, wv_t, wp_t, bp_r, g_r, b_r,
                               num_heads=num_heads, apply_ln=False,
                               compute_dtype=jnp.float32)
    y_attn = jax.block_until_ready(y_attn)
    y_attn_ref = attention_reference(x, params["wq"], params["wk"], params["wv"],
                                     params["wp"], params["bp"],
                                     num_heads=num_heads)
    assert y_attn.shape == (B, N, C)
    assert bool(jnp.allclose(y_attn, y_attn_ref, atol=5e-3, rtol=5e-3)), \
        "attention mismatch vs reference"

    # 2) Full AIMBlock forward with bf16 MXU inputs (f32 accumulation, f32
    #    softmax / LayerNorm / residual stream), looser tolerance for bf16.
    y_blk = aim_block_forward(x, params, num_heads=num_heads, block_scale=1.0,
                              num_tadapter=2, compute_dtype=jnp.bfloat16)
    y_blk = jax.block_until_ready(y_blk)
    y_blk_ref = aim_block_reference(x, params, num_heads=num_heads,
                                    block_scale=1.0, num_tadapter=2)
    assert y_blk.shape == (B, N, C)
    assert bool(jnp.allclose(y_blk, y_blk_ref, atol=2e-2, rtol=2e-2)), \
        "AIMBlock mismatch vs reference"

    print("KERNEL_OK")
</pallas_src>

<mosaic_0001>
module attributes {stable_mosaic.version = 11 : i64} {
  func.func @_attention_kernel(%arg0: i32, %arg1: memref<1x8x32xf32, #tpu.memory_space<vmem>>, %arg2: memref<1x32xf32, #tpu.memory_space<vmem>>, %arg3: memref<1x32xf32, #tpu.memory_space<vmem>>, %arg4: memref<32x32xf32, #tpu.memory_space<vmem>>, %arg5: memref<32x32xf32, #tpu.memory_space<vmem>>, %arg6: memref<32x32xf32, #tpu.memory_space<vmem>>, %arg7: memref<32x32xf32, #tpu.memory_space<vmem>>, %arg8: memref<1x32xf32, #tpu.memory_space<vmem>>, %arg9: memref<1x8x32xf32, #tpu.memory_space<vmem>>, %arg10: memref<8x32xf32, #tpu.memory_space<vmem>>) attributes {dimension_semantics = [#tpu.dimension_semantics<parallel>], iteration_bounds = array<i64: 2>, scalar_prefetch = 0 : i64, scratch_operands = 1 : i64, tpu.core_type = #tpu.core_type<tc>, window_params = [{transform_indices = @transform_0, window_bounds = array<i64: 1, 8, 32>}, {pipeline_mode = #tpu.pipeline_mode<synchronous>, transform_indices = @transform_1, window_bounds = array<i64: 1, 32>}, {pipeline_mode = #tpu.pipeline_mode<synchronous>, transform_indices = @transform_2, window_bounds = array<i64: 1, 32>}, {pipeline_mode = #tpu.pipeline_mode<synchronous>, transform_indices = @transform_3, window_bounds = array<i64: 32, 32>}, {pipeline_mode = #tpu.pipeline_mode<synchronous>, transform_indices = @transform_4, window_bounds = array<i64: 32, 32>}, {pipeline_mode = #tpu.pipeline_mode<synchronous>, transform_indices = @transform_5, window_bounds = array<i64: 32, 32>}, {pipeline_mode = #tpu.pipeline_mode<synchronous>, transform_indices = @transform_6, window_bounds = array<i64: 32, 32>}, {pipeline_mode = #tpu.pipeline_mode<synchronous>, transform_indices = @transform_7, window_bounds = array<i64: 1, 32>}, {transform_indices = @transform_8, window_bounds = array<i64: 1, 8, 32>}]} {
    %c0 = arith.constant 0 : index
    %c0_0 = arith.constant 0 : index
    %c0_1 = arith.constant 0 : index
    %0 = vector.load %arg1[%c0, %c0_0, %c0_1] : memref<1x8x32xf32, #tpu.memory_space<vmem>>, vector<1x8x32xf32>
    %1 = vector.shape_cast %0 : vector<1x8x32xf32> to vector<8x32xf32>
    %c0_2 = arith.constant 0 : index
    %c0_3 = arith.constant 0 : index
    %2 = vector.load %arg4[%c0_2, %c0_3] : memref<32x32xf32, #tpu.memory_space<vmem>>, vector<32x32xf32>
    %cst = arith.constant dense<0.000000e+00> : vector<8x32xf32>
    %3 = tpu.matmul %1, %2, %cst {dimension_numbers = #tpu.dot_dimension_numbers<[1], [0], [0], [1], [0, 0, 1, 1], [], []>} : vector<8x32xf32>, vector<32x32xf32>, vector<8x32xf32> -> vector<8x32xf32>
    %c0_4 = arith.constant 0 : index
    %c0_5 = arith.constant 0 : index
    %4 = vector.load %arg5[%c0_4, %c0_5] : memref<32x32xf32, #tpu.memory_space<vmem>>, vector<32x32xf32>
    %cst_6 = arith.constant dense<0.000000e+00> : vector<8x32xf32>
    %5 = tpu.matmul %1, %4, %cst_6 {dimension_numbers = #tpu.dot_dimension_numbers<[1], [0], [0], [1], [0, 0, 1, 1], [], []>} : vector<8x32xf32>, vector<32x32xf32>, vector<8x32xf32> -> vector<8x32xf32>
    %c0_7 = arith.constant 0 : index
    %c0_8 = arith.constant 0 : index
    %6 = vector.load %arg6[%c0_7, %c0_8] : memref<32x32xf32, #tpu.memory_space<vmem>>, vector<32x32xf32>
    %cst_9 = arith.constant dense<0.000000e+00> : vector<8x32xf32>
    %7 = tpu.matmul %1, %6, %cst_9 {dimension_numbers = #tpu.dot_dimension_numbers<[1], [0], [0], [1], [0, 0, 1, 1], [], []>} : vector<8x32xf32>, vector<32x32xf32>, vector<8x32xf32> -> vector<8x32xf32>
    %8 = vector.extract_strided_slice %3 {offsets = [0, 0], sizes = [8, 8], strides = [1, 1]} : vector<8x32xf32> to vector<8x8xf32>
    %9 = vector.extract_strided_slice %5 {offsets = [0, 0], sizes = [8, 8], strides = [1, 1]} : vector<8x32xf32> to vector<8x8xf32>
    %10 = vector.extract_strided_slice %7 {offsets = [0, 0], sizes = [8, 8], strides = [1, 1]} : vector<8x32xf32> to vector<8x8xf32>
    %cst_10 = arith.constant dense<0.000000e+00> : vector<8x8xf32>
    %11 = tpu.matmul %8, %9, %cst_10 {dimension_numbers = #tpu.dot_dimension_numbers<[1], [1], [0], [0], [0, 0, 1, 0], [], []>} : vector<8x8xf32>, vector<8x8xf32>, vector<8x8xf32> -> vector<8x8xf32>
    %cst_11 = arith.constant dense<0xFF800000> : vector<8xf32>
    %12 = vector.multi_reduction <maximumf>, %11, %cst_11 [1] : vector<8x8xf32> to vector<8xf32>
    %13 = vector.shape_cast %12 : vector<8xf32> to vector<8x1xf32>
    %14 = vector.broadcast %13 : vector<8x1xf32> to vector<8x8xf32>
    %15 = arith.subf %11, %14 : vector<8x8xf32>
    %16 = math.exp %15 : vector<8x8xf32>
    %cst_12 = arith.constant dense<0.000000e+00> : vector<8xf32>
    %17 = vector.multi_reduction <add>, %16, %cst_12 [1] : vector<8x8xf32> to vector<8xf32>
    %18 = vector.shape_cast %17 : vector<8xf32> to vector<8x1xf32>
    %cst_13 = arith.constant dense<0.000000e+00> : vector<8x8xf32>
    %19 = tpu.matmul %16, %10, %cst_13 {dimension_numbers = #tpu.dot_dimension_numbers<[1], [0], [0], [1], [0, 0, 1, 1], [], []>} : vector<8x8xf32>, vector<8x8xf32>, vector<8x8xf32> -> vector<8x8xf32>
    %20 = tpu.reciprocal %18 {approx = true} : vector<8x1xf32> -> vector<8x1xf32>
    %21 = vector.broadcast %20 : vector<8x1xf32> to vector<8x8xf32>
    %22 = arith.mulf %19, %21 : vector<8x8xf32>
    %c0_14 = arith.constant 0 : index
    %c0_15 = arith.constant 0 : index
    %23 = vector.load %arg10[%c0_14, %c0_15] : memref<8x32xf32, #tpu.memory_space<vmem>>, vector<8x8xf32>
    tpu.vector_store %arg10[%c0_14, %c0_15], %22 {strides = array<i32>} : memref<8x32xf32, #tpu.memory_space<vmem>>, vector<8x8xf32>,
    %24 = vector.extract_strided_slice %3 {offsets = [0, 8], sizes = [8, 8], strides = [1, 1]} : vector<8x32xf32> to vector<8x8xf32>
    %25 = vector.extract_strided_slice %5 {offsets = [0, 8], sizes = [8, 8], strides = [1, 1]} : vector<8x32xf32> to vector<8x8xf32>
    %26 = vector.extract_strided_slice %7 {offsets = [0, 8], sizes = [8, 8], strides = [1, 1]} : vector<8x32xf32> to vector<8x8xf32>
    %cst_16 = arith.constant dense<0.000000e+00> : vector<8x8xf32>
    %27 = tpu.matmul %24, %25, %cst_16 {dimension_numbers = #tpu.dot_dimension_numbers<[1], [1], [0], [0], [0, 0, 1, 0], [], []>} : vector<8x8xf32>, vector<8x8xf32>, vector<8x8xf32> -> vector<8x8xf32>
    %cst_17 = arith.constant dense<0xFF800000> : vector<8xf32>
    %28 = vector.multi_reduction <maximumf>, %27, %cst_17 [1] : vector<8x8xf32> to vector<8xf32>
    %29 = vector.shape_cast %28 : vector<8xf32> to vector<8x1xf32>
    %30 = vector.broadcast %29 : vector<8x1xf32> to vector<8x8xf32>
    %31 = arith.subf %27, %30 : vector<8x8xf32>
    %32 = math.exp %31 : vector<8x8xf32>
    %cst_18 = arith.constant dense<0.000000e+00> : vector<8xf32>
    %33 = vector.multi_reduction <add>, %32, %cst_18 [1] : vector<8x8xf32> to vector<8xf32>
    %34 = vector.shape_cast %33 : vector<8xf32> to vector<8x1xf32>
    %cst_19 = arith.constant dense<0.000000e+00> : vector<8x8xf32>
    %35 = tpu.matmul %32, %26, %cst_19 {dimension_numbers = #tpu.dot_dimension_numbers<[1], [0], [0], [1], [0, 0, 1, 1], [], []>} : vector<8x8xf32>, vector<8x8xf32>, vector<8x8xf32> -> vector<8x8xf32>
    %36 = tpu.reciprocal %34 {approx = true} : vector<8x1xf32> -> vector<8x1xf32>
    %37 = vector.broadcast %36 : vector<8x1xf32> to vector<8x8xf32>
    %38 = arith.mulf %35, %37 : vector<8x8xf32>
    %c0_20 = arith.constant 0 : index
    %c8 = arith.constant 8 : index
    %39 = vector.load %arg10[%c0_20, %c8] : memref<8x32xf32, #tpu.memory_space<vmem>>, vector<8x8xf32>
    tpu.vector_store %arg10[%c0_20, %c8], %38 {strides = array<i32>} : memref<8x32xf32, #tpu.memory_space<vmem>>, vector<8x8xf32>,
    %40 = vector.extract_strided_slice %3 {offsets = [0, 16], sizes = [8, 8], strides = [1, 1]} : vector<8x32xf32> to vector<8x8xf32>
    %41 = vector.extract_strided_slice %5 {offsets = [0, 16], sizes = [8, 8], strides = [1, 1]} : vector<8x32xf32> to vector<8x8xf32>
    %42 = vector.extract_strided_slice %7 {offsets = [0, 16], sizes = [8, 8], strides = [1, 1]} : vector<8x32xf32> to vector<8x8xf32>
    %cst_21 = arith.constant dense<0.000000e+00> : vector<8x8xf32>
    %43 = tpu.matmul %40, %41, %cst_21 {dimension_numbers = #tpu.dot_dimension_numbers<[1], [1], [0], [0], [0, 0, 1, 0], [], []>} : vector<8x8xf32>, vector<8x8xf32>, vector<8x8xf32> -> vector<8x8xf32>
    %cst_22 = arith.constant dense<0xFF800000> : vector<8xf32>
    %44 = vector.multi_reduction <maximumf>, %43, %cst_22 [1] : vector<8x8xf32> to vector<8xf32>
    %45 = vector.shape_cast %44 : vector<8xf32> to vector<8x1xf32>
    %46 = vector.broadcast %45 : vector<8x1xf32> to vector<8x8xf32>
    %47 = arith.subf %43, %46 : vector<8x8xf32>
    %48 = math.exp %47 : vector<8x8xf32>
    %cst_23 = arith.constant dense<0.000000e+00> : vector<8xf32>
    %49 = vector.multi_reduction <add>, %48, %cst_23 [1] : vector<8x8xf32> to vector<8xf32>
    %50 = vector.shape_cast %49 : vector<8xf32> to vector<8x1xf32>
    %cst_24 = arith.constant dense<0.000000e+00> : vector<8x8xf32>
    %51 = tpu.matmul %48, %42, %cst_24 {dimension_numbers = #tpu.dot_dimension_numbers<[1], [0], [0], [1], [0, 0, 1, 1], [], []>} : vector<8x8xf32>, vector<8x8xf32>, vector<8x8xf32> -> vector<8x8xf32>
    %52 = tpu.reciprocal %50 {approx = true} : vector<8x1xf32> -> vector<8x1xf32>
    %53 = vector.broadcast %52 : vector<8x1xf32> to vector<8x8xf32>
    %54 = arith.mulf %51, %53 : vector<8x8xf32>
    %c0_25 = arith.constant 0 : index
    %c16 = arith.constant 16 : index
    %55 = vector.load %arg10[%c0_25, %c16] : memref<8x32xf32, #tpu.memory_space<vmem>>, vector<8x8xf32>
    tpu.vector_store %arg10[%c0_25, %c16], %54 {strides = array<i32>} : memref<8x32xf32, #tpu.memory_space<vmem>>, vector<8x8xf32>,
    %56 = vector.extract_strided_slice %3 {offsets = [0, 24], sizes = [8, 8], strides = [1, 1]} : vector<8x32xf32> to vector<8x8xf32>
    %57 = vector.extract_strided_slice %5 {offsets = [0, 24], sizes = [8, 8], strides = [1, 1]} : vector<8x32xf32> to vector<8x8xf32>
    %58 = vector.extract_strided_slice %7 {offsets = [0, 24], sizes = [8, 8], strides = [1, 1]} : vector<8x32xf32> to vector<8x8xf32>
    %cst_26 = arith.constant dense<0.000000e+00> : vector<8x8xf32>
    %59 = tpu.matmul %56, %57, %cst_26 {dimension_numbers = #tpu.dot_dimension_numbers<[1], [1], [0], [0], [0, 0, 1, 0], [], []>} : vector<8x8xf32>, vector<8x8xf32>, vector<8x8xf32> -> vector<8x8xf32>
    %cst_27 = arith.constant dense<0xFF800000> : vector<8xf32>
    %60 = vector.multi_reduction <maximumf>, %59, %cst_27 [1] : vector<8x8xf32> to vector<8xf32>
    %61 = vector.shape_cast %60 : vector<8xf32> to vector<8x1xf32>
    %62 = vector.broadcast %61 : vector<8x1xf32> to vector<8x8xf32>
    %63 = arith.subf %59, %62 : vector<8x8xf32>
    %64 = math.exp %63 : vector<8x8xf32>
    %cst_28 = arith.constant dense<0.000000e+00> : vector<8xf32>
    %65 = vector.multi_reduction <add>, %64, %cst_28 [1] : vector<8x8xf32> to vector<8xf32>
    %66 = vector.shape_cast %65 : vector<8xf32> to vector<8x1xf32>
    %cst_29 = arith.constant dense<0.000000e+00> : vector<8x8xf32>
    %67 = tpu.matmul %64, %58, %cst_29 {dimension_numbers = #tpu.dot_dimension_numbers<[1], [0], [0], [1], [0, 0, 1, 1], [], []>} : vector<8x8xf32>, vector<8x8xf32>, vector<8x8xf32> -> vector<8x8xf32>
    %68 = tpu.reciprocal %66 {approx = true} : vector<8x1xf32> -> vector<8x1xf32>
    %69 = vector.broadcast %68 : vector<8x1xf32> to vector<8x8xf32>
    %70 = arith.mulf %67, %69 : vector<8x8xf32>
    %c0_30 = arith.constant 0 : index
    %c24 = arith.constant 24 : index
    %71 = vector.load %arg10[%c0_30, %c24] : memref<8x32xf32, #tpu.memory_space<vmem>>, vector<8x8xf32>
    tpu.vector_store %arg10[%c0_30, %c24], %70 {strides = array<i32>} : memref<8x32xf32, #tpu.memory_space<vmem>>, vector<8x8xf32>,
    %c0_31 = arith.constant 0 : index
    %c0_32 = arith.constant 0 : index
    %72 = vector.load %arg10[%c0_31, %c0_32] : memref<8x32xf32, #tpu.memory_space<vmem>>, vector<8x32xf32>
    %c0_33 = arith.constant 0 : index
    %c0_34 = arith.constant 0 : index
    %73 = vector.load %arg7[%c0_33, %c0_34] : memref<32x32xf32, #tpu.memory_space<vmem>>, vector<32x32xf32>
    %cst_35 = arith.constant dense<0.000000e+00> : vector<8x32xf32>
    %74 = tpu.matmul %72, %73, %cst_35 {dimension_numbers = #tpu.dot_dimension_numbers<[1], [0], [0], [1], [0, 0, 1, 1], [], []>} : vector<8x32xf32>, vector<32x32xf32>, vector<8x32xf32> -> vector<8x32xf32>
    %c0_36 = arith.constant 0 : index
    %c0_37 = arith.constant 0 : index
    %75 = vector.load %arg8[%c0_36, %c0_37] : memref<1x32xf32, #tpu.memory_space<vmem>>, vector<1x32xf32>
    %76 = vector.broadcast %75 : vector<1x32xf32> to vector<8x32xf32>
    %77 = arith.addf %74, %76 : vector<8x32xf32>
    %c0_38 = arith.constant 0 : index
    %c0_39 = arith.constant 0 : index
    %c0_40 = arith.constant 0 : index
    %78 = vector.load %arg9[%c0_38, %c0_39, %c0_40] : memref<1x8x32xf32, #tpu.memory_space<vmem>>, vector<1x8x32xf32>
    %79 = vector.shape_cast %78 : vector<1x8x32xf32> to vector<8x32xf32>
    %80 = vector.shape_cast %77 : vector<8x32xf32> to vector<1x8x32xf32>
    tpu.vector_store %arg9[%c0_38, %c0_39, %c0_40], %80 {strides = array<i32>} : memref<1x8x32xf32, #tpu.memory_space<vmem>>, vector<1x8x32xf32>,
    return
  }
  func.func @transform_0(%arg0: i32) -> (i32, i32, i32) {
    %c0_i32 = arith.constant 0 : i32
    %c0_i32_0 = arith.constant 0 : i32
    %c0_i32_1 = arith.constant 0 : i32
    return %arg0, %c0_i32, %c0_i32_0 : i32, i32, i32
  }
  func.func @transform_1(%arg0: i32) -> (i32, i32) {
    %c0_i32 = arith.constant 0 : i32
    %c0_i32_0 = arith.constant 0 : i32
    %c0_i32_1 = arith.constant 0 : i32
    return %c0_i32, %c0_i32_0 : i32, i32
  }
  func.func @transform_2(%arg0: i32) -> (i32, i32) {
    %c0_i32 = arith.constant 0 : i32
    %c0_i32_0 = arith.constant 0 : i32
    %c0_i32_1 = arith.constant 0 : i32
    return %c0_i32, %c0_i32_0 : i32, i32
  }
  func.func @transform_3(%arg0: i32) -> (i32, i32) {
    %c0_i32 = arith.constant 0 : i32
    %c0_i32_0 = arith.constant 0 : i32
    %c0_i32_1 = arith.constant 0 : i32
    return %c0_i32, %c0_i32_0 : i32, i32
  }
  func.func @transform_4(%arg0: i32) -> (i32, i32) {
    %c0_i32 = arith.constant 0 : i32
    %c0_i32_0 = arith.constant 0 : i32
    %c0_i32_1 = arith.constant 0 : i32
    return %c0_i32, %c0_i32_0 : i32, i32
  }
  func.func @transform_5(%arg0: i32) -> (i32, i32) {
    %c0_i32 = arith.constant 0 : i32
    %c0_i32_0 = arith.constant 0 : i32
    %c0_i32_1 = arith.constant 0 : i32
    return %c0_i32, %c0_i32_0 : i32, i32
  }
  func.func @transform_6(%arg0: i32) -> (i32, i32) {
    %c0_i32 = arith.constant 0 : i32
    %c0_i32_0 = arith.constant 0 : i32
    %c0_i32_1 = arith.constant 0 : i32
    return %c0_i32, %c0_i32_0 : i32, i32
  }
  func.func @transform_7(%arg0: i32) -> (i32, i32) {
    %c0_i32 = arith.constant 0 : i32
    %c0_i32_0 = arith.constant 0 : i32
    %c0_i32_1 = arith.constant 0 : i32
    return %c0_i32, %c0_i32_0 : i32, i32
  }
  func.func @transform_8(%arg0: i32) -> (i32, i32, i32) {
    %c0_i32 = arith.constant 0 : i32
    %c0_i32_0 = arith.constant 0 : i32
    %c0_i32_1 = arith.constant 0 : i32
    return %arg0, %c0_i32, %c0_i32_0 : i32, i32, i32
  }
}

</mosaic_0001>

<llo_original>
// kernel: tpu_custom_call.1
$region0: #{tpu_custom_call.1}
  #allocation0 [shape = 'u32[]', space=smem, size = 0x4, offset = 0x4, fixed_abs, tag = 'smem constant byte address 0x4 - core index']
  #allocation1 [shape = 'u32[144,128]{1,0:T(1,128)}', space=vmem, size = 0x12000, scoped, tag = 'internal scratch']
  #allocation2 [shape = 'f32[8,32]{1,0:T(8,128)}', space=vmem, size = 0x1000, scoped, tag = 'scratch operand']
  %s0 = inlined_call_operand.hbm [shape: f32[2,8,32], index: 0, kind: input, shape index: {}]
  %s1 = inlined_call_operand.vmem [shape: f32[1,32], index: 1, kind: input, shape index: {}]
  %s2 = inlined_call_operand.vmem [shape: f32[1,32], index: 2, kind: input, shape index: {}]
  %s3 = inlined_call_operand.hbm [shape: f32[32,32], index: 3, kind: input, shape index: {}]
  %s4 = inlined_call_operand.hbm [shape: f32[32,32], index: 4, kind: input, shape index: {}]
  %s5 = inlined_call_operand.hbm [shape: f32[32,32], index: 5, kind: input, shape index: {}]
  %s6 = inlined_call_operand.hbm [shape: f32[32,32], index: 6, kind: input, shape index: {}]
  %s7 = inlined_call_operand.vmem [shape: f32[1,32], index: 7, kind: input, shape index: {}]
  %s8 = inlined_call_operand.hbm [shape: f32[2,8,32], index: 8, kind: output, shape index: {}]
  %s9 = sld [smem:[#allocation0]]
  $region85: #{tpu_custom_call.1} parent=0
    _
  %s11 = ssub.s32 1, %s9
  %s12 = scalar_select 0, %s11, %s9
  $region1: #{tpu_custom_call.1} parent=0
    #allocation3 [shape = 'u8[8192]{0}', space=vmem, size = 0x2000, scoped, tag = 'input window, operand 0']
    #allocation4 [shape = 's32[2]{0}', space=sflag, size = 0x8, scoped, tag = 'scoped memory for tpu_custom_call.1']
    #allocation5 [shape = 's32[2]{0}', space=sflag, size = 0x8, scoped, tag = 'scoped memory for tpu_custom_call.1']
    #allocation6 [shape = 'u8[16384]{0}', space=vmem, size = 0x4000, scoped, tag = 'input window, operand 3, single buffered']
    #allocation7 [shape = 's32[1]{0}', space=sflag, size = 0x4, scoped, tag = 'scoped memory for tpu_custom_call.1']
    #allocation8 [shape = 'u8[16384]{0}', space=vmem, size = 0x4000, scoped, tag = 'input window, operand 4, single buffered']
    #allocation9 [shape = 'u8[16384]{0}', space=vmem, size = 0x4000, scoped, tag = 'input window, operand 5, single buffered']
    #allocation10 [shape = 's32[1]{0}', space=sflag, size = 0x4, scoped, tag = 'scoped memory for tpu_custom_call.1']
    #allocation11 [shape = 'u8[16384]{0}', space=vmem, size = 0x4000, scoped, tag = 'input window, operand 6, single buffered']
    #allocation12 [shape = 'u8[8192]{0}', space=vmem, size = 0x2000, scoped, tag = 'output window, operand 0']
    %13 = vsyncpa [#allocation4], 0
    %s14 = scalar_lea.sflag [#allocation4], 1
    %15 = vsyncpa %s14, 0
    %16 = vsyncpa [#allocation7], 0
    %17 = vsyncpa [#allocation10], 0
    %18 = vsyncpa [#allocation5], 0
    %s19 = scalar_lea.sflag [#allocation5], 1
    %20 = vsyncpa %s19, 0
    loop: start=0, step=1, limit=4
    $region2: #{tpu_custom_call.1} parent=1 // loop_pre_header
      _
    $region3: #{tpu_custom_call.1} parent=1 // loop_header
      %s22 = sphi 0, %s26
      %p23 = scmp.ge.s32.totalorder %s22, 4
      %s32 = sphi 0, %s34
      %s35 = sphi 0, %s32
      %s36 = sphi 0, %s35
      %s52 = sphi 0, %s36
      %s56 = sphi 0, %s56
      %s58 = sphi 0, %s56
      %s59 = sphi 0, %s58
      %s73 = sphi 0, %s59
      %s77 = sphi 0, %s77
      %s79 = sphi 0, %s77
      %s80 = sphi 0, %s79
      %s94 = sphi 0, %s80
      %s98 = sphi 0, %s98
      %s100 = sphi 0, %s98
      %s101 = sphi 0, %s100
      %s115 = sphi 0, %s101
      %s119 = sphi 0, %s119
      %s121 = sphi 0, %s119
      %s122 = sphi 0, %s121
      %s136 = sphi 0, %s122
      %s140 = sphi 0, %s140
      %s142 = sphi 0, %s140
      %s143 = sphi 0, %s142
      %s157 = sphi 0, %s143
      %s161 = sphi 0, %s161
      %s163 = sphi 0, %s161
      %s164 = sphi 0, %s163
      %s178 = sphi 0, %s164
      %s182 = sphi 0, %s182
      %s184 = sphi 0, %s182
      %s185 = sphi 0, %s184
      %s199 = sphi 0, %s185
      %s205 = sphi 0, %s207
      %s208 = sphi 0, %s205
      %s209 = sphi 0, %s208
      %s225 = sphi 0, %s209
    $region4: #{tpu_custom_call.1} parent=1 // loop_header_branch
      %25 = sbr.rel (%p23) target = $region8
    $region5: #{tpu_custom_call.1} parent=1 // loop_body
      %s27 = ssub.s32 %s22, 1
      %s28 = ssub.s32 %s22, 2
      %s29 = sadd.s32 %s22, 1
      %s30 = ssub.s32 %s22, %s29
      %p31 = scmp.eq.s32.totalorder %s30, 0
      %s33 = sadd.s32 %s32, 1
      %s34 = scalar_select %p31, %s32, %s33
      %p37 = pneg %p31
      %p38 = scmp.eq.s32.totalorder %s22, 1
      %p39 = por %p37, %p38
      %p40 = scmp.ne.s32.totalorder %s32, %s35
      %p41 = scmp.eq.s32.totalorder %s22, 0
      %p42 = por %p40, %p41
      %p43 = scmp.ne.s32.totalorder %s32, %s35
      %p44 = scmp.eq.s32.totalorder %s27, 1
      %p45 = por %p43, %p44
      %p46 = scmp.ne.s32.totalorder %s35, %s36
      %p47 = scmp.eq.s32.totalorder %s27, 0
      %p48 = por %p46, %p47
      %p49 = scmp.ne.s32.totalorder %s35, %s36
      %p50 = scmp.eq.s32.totalorder %s28, 1
      %p51 = por %p49, %p50
      %p53 = scmp.ne.s32.totalorder %s36, %s52
      %p54 = scmp.eq.s32.totalorder %s28, 0
      %p55 = por %p53, %p54
      %s57 = sadd.s32 %s56, 1
      %p60 = scmp.eq.s32.totalorder %s22, 1
      %p61 = scmp.ne.s32.totalorder %s56, %s58
      %p62 = scmp.eq.s32.totalorder %s22, 0
      %p63 = por %p61, %p62
      %p64 = scmp.ne.s32.totalorder %s56, %s58
      %p65 = scmp.eq.s32.totalorder %s27, 1
      %p66 = por %p64, %p65
      %p67 = scmp.ne.s32.totalorder %s58, %s59
      %p68 = scmp.eq.s32.totalorder %s27, 0
      %p69 = por %p67, %p68
      %p70 = scmp.ne.s32.totalorder %s58, %s59
      %p71 = scmp.eq.s32.totalorder %s28, 1
      %p72 = por %p70, %p71
      %p74 = scmp.ne.s32.totalorder %s59, %s73
      %p75 = scmp.eq.s32.totalorder %s28, 0
      %p76 = por %p74, %p75
      %s78 = sadd.s32 %s77, 1
      %p81 = scmp.eq.s32.totalorder %s22, 1
      %p82 = scmp.ne.s32.totalorder %s77, %s79
      %p83 = scmp.eq.s32.totalorder %s22, 0
      %p84 = por %p82, %p83
      %p85 = scmp.ne.s32.totalorder %s77, %s79
      %p86 = scmp.eq.s32.totalorder %s27, 1
      %p87 = por %p85, %p86
      %p88 = scmp.ne.s32.totalorder %s79, %s80
      %p89 = scmp.eq.s32.totalorder %s27, 0
      %p90 = por %p88, %p89
      %p91 = scmp.ne.s32.totalorder %s79, %s80
      %p92 = scmp.eq.s32.totalorder %s28, 1
      %p93 = por %p91, %p92
      %p95 = scmp.ne.s32.totalorder %s80, %s94
      %p96 = scmp.eq.s32.totalorder %s28, 0
      %p97 = por %p95, %p96
      %s99 = sadd.s32 %s98, 1
      %p102 = scmp.eq.s32.totalorder %s22, 1
      %p103 = scmp.ne.s32.totalorder %s98, %s100
      %p104 = scmp.eq.s32.totalorder %s22, 0
      %p105 = por %p103, %p104
      %p106 = scmp.ne.s32.totalorder %s98, %s100
      %p107 = scmp.eq.s32.totalorder %s27, 1
      %p108 = por %p106, %p107
      %p109 = scmp.ne.s32.totalorder %s100, %s101
      %p110 = scmp.eq.s32.totalorder %s27, 0
      %p111 = por %p109, %p110
      %p112 = scmp.ne.s32.totalorder %s100, %s101
      %p113 = scmp.eq.s32.totalorder %s28, 1
      %p114 = por %p112, %p113
      %p116 = scmp.ne.s32.totalorder %s101, %s115
      %p117 = scmp.eq.s32.totalorder %s28, 0
      %p118 = por %p116, %p117
      %s120 = sadd.s32 %s119, 1
      %p123 = scmp.eq.s32.totalorder %s22, 1
      %p124 = scmp.ne.s32.totalorder %s119, %s121
      %p125 = scmp.eq.s32.totalorder %s22, 0
      %p126 = por %p124, %p125
      %p127 = scmp.ne.s32.totalorder %s119, %s121
      %p128 = scmp.eq.s32.totalorder %s27, 1
      %p129 = por %p127, %p128
      %p130 = scmp.ne.s32.totalorder %s121, %s122
      %p131 = scmp.eq.s32.totalorder %s27, 0
      %p132 = por %p130, %p131
      %p133 = scmp.ne.s32.totalorder %s121, %s122
      %p134 = scmp.eq.s32.totalorder %s28, 1
      %p135 = por %p133, %p134
      %p137 = scmp.ne.s32.totalorder %s122, %s136
      %p138 = scmp.eq.s32.totalorder %s28, 0
      %p139 = por %p137, %p138
      %s141 = sadd.s32 %s140, 1
      %p144 = scmp.eq.s32.totalorder %s22, 1
      %p145 = scmp.ne.s32.totalorder %s140, %s142
      %p146 = scmp.eq.s32.totalorder %s22, 0
      %p147 = por %p145, %p146
      %p148 = scmp.ne.s32.totalorder %s140, %s142
      %p149 = scmp.eq.s32.totalorder %s27, 1
      %p150 = por %p148, %p149
      %p151 = scmp.ne.s32.totalorder %s142, %s143
      %p152 = scmp.eq.s32.totalorder %s27, 0
      %p153 = por %p151, %p152
      %p154 = scmp.ne.s32.totalorder %s142, %s143
      %p155 = scmp.eq.s32.totalorder %s28, 1
      %p156 = por %p154, %p155
      %p158 = scmp.ne.s32.totalorder %s143, %s157
      %p159 = scmp.eq.s32.totalorder %s28, 0
      %p160 = por %p158, %p159
      %s162 = sadd.s32 %s161, 1
      %p165 = scmp.eq.s32.totalorder %s22, 1
      %p166 = scmp.ne.s32.totalorder %s161, %s163
      %p167 = scmp.eq.s32.totalorder %s22, 0
      %p168 = por %p166, %p167
      %p169 = scmp.ne.s32.totalorder %s161, %s163
      %p170 = scmp.eq.s32.totalorder %s27, 1
      %p171 = por %p169, %p170
      %p172 = scmp.ne.s32.totalorder %s163, %s164
      %p173 = scmp.eq.s32.totalorder %s27, 0
      %p174 = por %p172, %p173
      %p175 = scmp.ne.s32.totalorder %s163, %s164
      %p176 = scmp.eq.s32.totalorder %s28, 1
      %p177 = por %p175, %p176
      %p179 = scmp.ne.s32.totalorder %s164, %s178
      %p180 = scmp.eq.s32.totalorder %s28, 0
      %p181 = por %p179, %p180
      %s183 = sadd.s32 %s182, 1
      %p186 = scmp.eq.s32.totalorder %s22, 1
      %p187 = scmp.ne.s32.totalorder %s182, %s184
      %p188 = scmp.eq.s32.totalorder %s22, 0
      %p189 = por %p187, %p188
      %p190 = scmp.ne.s32.totalorder %s182, %s184
      %p191 = scmp.eq.s32.totalorder %s27, 1
      %p192 = por %p190, %p191
      %p193 = scmp.ne.s32.totalorder %s184, %s185
      %p194 = scmp.eq.s32.totalorder %s27, 0
      %p195 = por %p193, %p194
      %p196 = scmp.ne.s32.totalorder %s184, %s185
      %p197 = scmp.eq.s32.totalorder %s28, 1
      %p198 = por %p196, %p197
      %p200 = scmp.ne.s32.totalorder %s185, %s199
      %p201 = scmp.eq.s32.totalorder %s28, 0
      %p202 = por %p200, %p201
      %s203 = ssub.s32 %s22, %s29
      %p204 = scmp.eq.s32.totalorder %s203, 0
      %s206 = sadd.s32 %s205, 1
      %s207 = scalar_select %p204, %s205, %s206
      %p210 = pneg %p204
      %p211 = scmp.eq.s32.totalorder %s22, 1
      %p212 = por %p210, %p211
      %p213 = scmp.ne.s32.totalorder %s205, %s208
      %p214 = scmp.eq.s32.totalorder %s22, 0
      %p215 = por %p213, %p214
      %p216 = scmp.ne.s32.totalorder %s205, %s208
      %p217 = scmp.eq.s32.totalorder %s27, 1
      %p218 = por %p216, %p217
      %p219 = scmp.ne.s32.totalorder %s208, %s209
      %p220 = scmp.eq.s32.totalorder %s27, 0
      %p221 = por %p219, %p220
      %p222 = scmp.ne.s32.totalorder %s208, %s209
      %p223 = scmp.eq.s32.totalorder %s28, 1
      %p224 = por %p222, %p223
      %p226 = scmp.ne.s32.totalorder %s209, %s225
      %p227 = scmp.eq.s32.totalorder %s28, 0
      %p228 = por %p226, %p227
      %p229 = scmp.le.s32.totalorder 1, %s22
      %p230 = scmp.lt.s32.totalorder %s22, 3
      %p231 = pnand %p229, %p230
      %p232 = pneg %p231
      // Predicated region
      $region9: #{tpu_custom_call.1} parent=5 // pred_check
        _
      $region10: #{tpu_custom_call.1} parent=5 // pred_check_branch
        %234 = sbr.rel (%p231) target = $region12
      $region11: #{tpu_custom_call.1} parent=5 // pred_region
        %s235 = ssub.s32 %s22, 1
        // Predicated region
        $region13: #{tpu_custom_call.1} parent=11 // pred_check
          %p236 = pneg %p69
        $region14: #{tpu_custom_call.1} parent=11 // pred_check_branch
          %238 = sbr.rel (%p236) target = $region16
        $region15: #{tpu_custom_call.1} parent=11 // pred_region
          _
        $region16: #{tpu_custom_call.1} parent=11 // pred_fallthru
          _
        // Predicated region
        $region17: #{tpu_custom_call.1} parent=11 // pred_check
          %p239 = pneg %p90
        $region18: #{tpu_custom_call.1} parent=11 // pred_check_branch
          %241 = sbr.rel (%p239) target = $region20
        $region19: #{tpu_custom_call.1} parent=11 // pred_region
          _
        $region20: #{tpu_custom_call.1} parent=11 // pred_fallthru
          _
        // Predicated region
        $region21: #{tpu_custom_call.1} parent=11 // pred_check
          %p242 = pneg %p111
        $region22: #{tpu_custom_call.1} parent=11 // pred_check_branch
          %244 = sbr.rel (%p242) target = $region24
        $region23: #{tpu_custom_call.1} parent=11 // pred_region
          %s246 = ssub.s32 512, 512
          %247 = vsyncadd [#allocation7], %s246
          %s248 = sshll.u32 [#allocation6], 4
          %s249 = int_to_ptr.vmem [resolvable:$true] %s248
          %254 = dma.hbm_to_vmem [thread:$0]  %s3, 512, %s249, [#allocation7], 128, 128, 8
        $region24: #{tpu_custom_call.1} parent=11 // pred_fallthru
          _
        // Predicated region
        $region25: #{tpu_custom_call.1} parent=11 // pred_check
          %p255 = pneg %p132
        $region26: #{tpu_custom_call.1} parent=11 // pred_check_branch
          %257 = sbr.rel (%p255) target = $region28
        $region27: #{tpu_custom_call.1} parent=11 // pred_region
          %s259 = ssub.s32 512, 512
          %260 = vsyncadd [#allocation7], %s259
          %s261 = sshll.u32 [#allocation8], 4
          %s262 = int_to_ptr.vmem [resolvable:$true] %s261
          %267 = dma.hbm_to_vmem [thread:$0]  %s4, 512, %s262, [#allocation7], 128, 128, 8
        $region28: #{tpu_custom_call.1} parent=11 // pred_fallthru
          _
        // Predicated region
        $region29: #{tpu_custom_call.1} parent=11 // pred_check
          %p268 = pneg %p153
        $region30: #{tpu_custom_call.1} parent=11 // pred_check_branch
          %270 = sbr.rel (%p268) target = $region32
        $region31: #{tpu_custom_call.1} parent=11 // pred_region
          %s272 = ssub.s32 512, 512
          %273 = vsyncadd [#allocation10], %s272
          %s274 = sshll.u32 [#allocation9], 4
          %s275 = int_to_ptr.vmem [resolvable:$true] %s274
          %280 = dma.hbm_to_vmem [thread:$0]  %s5, 512, %s275, [#allocation10], 128, 128, 8
        $region32: #{tpu_custom_call.1} parent=11 // pred_fallthru
          _
        // Predicated region
        $region33: #{tpu_custom_call.1} parent=11 // pred_check
          %p281 = pneg %p174
        $region34: #{tpu_custom_call.1} parent=11 // pred_check_branch
          %283 = sbr.rel (%p281) target = $region36
        $region35: #{tpu_custom_call.1} parent=11 // pred_region
          %s285 = ssub.s32 512, 512
          %286 = vsyncadd [#allocation10], %s285
          %s287 = sshll.u32 [#allocation11], 4
          %s288 = int_to_ptr.vmem [resolvable:$true] %s287
          %293 = dma.hbm_to_vmem [thread:$0]  %s6, 512, %s288, [#allocation10], 128, 128, 8
        $region36: #{tpu_custom_call.1} parent=11 // pred_fallthru
          _
        // Predicated region
        $region37: #{tpu_custom_call.1} parent=11 // pred_check
          %p294 = pneg %p195
        $region38: #{tpu_custom_call.1} parent=11 // pred_check_branch
          %296 = sbr.rel (%p294) target = $region40
        $region39: #{tpu_custom_call.1} parent=11 // pred_region
          _
        $region40: #{tpu_custom_call.1} parent=11 // pred_fallthru
          _
      $region12: #{tpu_custom_call.1} parent=5 // pred_fallthru
        _
      %p297 = scmp.lt.s32.totalorder %s22, 2
      // Predicated region
      $region41: #{tpu_custom_call.1} parent=5 // pred_check
        %p298 = pneg %p297
      $region42: #{tpu_custom_call.1} parent=5 // pred_check_branch
        %300 = sbr.rel (%p298) target = $region44
      $region43: #{tpu_custom_call.1} parent=5 // pred_region
        // Predicated region
        $region45: #{tpu_custom_call.1} parent=43 // pred_check
          %p301 = pneg %p42
        $region46: #{tpu_custom_call.1} parent=43 // pred_check_branch
          %303 = sbr.rel (%p301) target = $region48
        $region47: #{tpu_custom_call.1} parent=43 // pred_region
          %s304 = sand.u32 %s32, 1
          %s305 = scalar_lea.sflag [#allocation4], %s304
          %s306 = sand.u32 %s32, 1
          %s307 = smul.addr %s306, 8
          %s308 = scalar_lea.vmem [#allocation3], %s307
          %s310 = ssub.s32 128, 128
          %311 = vsyncadd %s305, %s310
          %s312 = smul.addr %s22, 128
          %s313 = scalar_lea.hbm %s0, %s312
          %s315 = sshll.u32 %s308, 4
          %s316 = int_to_ptr.vmem [resolvable:$true] %s315
          %318 = dma.hbm_to_vmem [thread:$0]  %s313, 128, %s316, %s305
        $region48: #{tpu_custom_call.1} parent=43 // pred_fallthru
          _
      $region44: #{tpu_custom_call.1} parent=5 // pred_fallthru
        _
      %p319 = scmp.le.s32.totalorder 1, %s22
      %p320 = scmp.lt.s32.totalorder %s22, 3
      %p321 = pnand %p319, %p320
      %p322 = pneg %p321
      // Predicated region
      $region49: #{tpu_custom_call.1} parent=5 // pred_check
        _
      $region50: #{tpu_custom_call.1} parent=5 // pred_check_branch
        %324 = sbr.rel (%p321) target = $region52
      $region51: #{tpu_custom_call.1} parent=5 // pred_region
        %s325 = ssub.s32 %s22, 1
        %s326 = sand.u32 %s35, 1
        %s327 = scalar_lea.sflag [#allocation4], %s326
        %s328 = sand.u32 %s35, 1
        %s329 = smul.addr %s328, 8
        %s330 = scalar_lea.vmem [#allocation3], %s329
        // Predicated region
        $region53: #{tpu_custom_call.1} parent=51 // pred_check
          %p331 = pneg %p48
        $region54: #{tpu_custom_call.1} parent=51 // pred_check_branch
          %333 = sbr.rel (%p331) target = $region56
        $region55: #{tpu_custom_call.1} parent=51 // pred_region
          %334 = dma.done %s327, 128
        $region56: #{tpu_custom_call.1} parent=51 // pred_fallthru
          _
        // Predicated region
        $region57: #{tpu_custom_call.1} parent=51 // pred_check
          %p335 = pneg %p111
        $region58: #{tpu_custom_call.1} parent=51 // pred_check_branch
          %337 = sbr.rel (%p335) target = $region60
        $region59: #{tpu_custom_call.1} parent=51 // pred_region
          %338 = dma.done [#allocation7], 512
        $region60: #{tpu_custom_call.1} parent=51 // pred_fallthru
          _
        // Predicated region
        $region61: #{tpu_custom_call.1} parent=51 // pred_check
          %p339 = pneg %p132
        $region62: #{tpu_custom_call.1} parent=51 // pred_check_branch
          %341 = sbr.rel (%p339) target = $region64
        $region63: #{tpu_custom_call.1} parent=51 // pred_region
          %342 = dma.done [#allocation7], 512
        $region64: #{tpu_custom_call.1} parent=51 // pred_fallthru
          _
        // Predicated region
        $region65: #{tpu_custom_call.1} parent=51 // pred_check
          %p343 = pneg %p153
        $region66: #{tpu_custom_call.1} parent=51 // pred_check_branch
          %345 = sbr.rel (%p343) target = $region68
        $region67: #{tpu_custom_call.1} parent=51 // pred_region
          %346 = dma.done [#allocation10], 512
        $region68: #{tpu_custom_call.1} parent=51 // pred_fallthru
          _
        // Predicated region
        $region69: #{tpu_custom_call.1} parent=51 // pred_check
          %p347 = pneg %p174
        $region70: #{tpu_custom_call.1} parent=51 // pred_check_branch
          %349 = sbr.rel (%p347) target = $region72
        $region71: #{tpu_custom_call.1} parent=51 // pred_region
          %350 = dma.done [#allocation10], 512
        $region72: #{tpu_custom_call.1} parent=51 // pred_fallthru
          _
        %s351 = sand.u32 %s35, 1
        %s352 = scalar_lea.sflag [#allocation4], %s351
        %s353 = sand.u32 %s35, 1
        %s354 = smul.addr %s353, 8
        %s355 = scalar_lea.vmem [#allocation3], %s354
        %p356 = pneg %p48
        %p357 = pneg %p45
        %p358 = pneg %p69
        %p359 = pneg %p66
        %p360 = pneg %p90
        %p361 = pneg %p87
        %p362 = pneg %p111
        %p363 = pneg %p108
        %p364 = pneg %p132
        %p365 = pneg %p129
        %p366 = pneg %p153
        %p367 = pneg %p150
        %p368 = pneg %p174
        %p369 = pneg %p171
        %p370 = pneg %p195
        %p371 = pneg %p192
        %p372 = pneg %p221
        %p373 = pneg %p218
        %s374 = sand.u32 %s208, 1
        %s375 = scalar_lea.sflag [#allocation5], %s374
        %s376 = sand.u32 %s208, 1
        %s377 = smul.addr %s376, 8
        %s378 = scalar_lea.vmem [#allocation12], %s377
        %v379 = vld [vmem:[%s330] sm:$0xff]
        %v380 = vld [vmem:[#allocation6] sm:$0xff]
        %v381 = vld [vmem:[#allocation6 + $0x8] sm:$0xff]
        %v382 = vld [vmem:[#allocation6 + $0x10] sm:$0xff]
        %v383 = vld [vmem:[#allocation6 + $0x18] sm:$0xff]
        %vm384 = vcmask 261120
        %v386 = vsel %vm384, %v379, 0
        %388 = vmatprep.subr.mxu0 0.0
        %389 = vmatpush1.msra.mxu0 %v380
        %390 = vmatprep.subr.mxu0 0.0
        %391 = vmatpush1.msra.mxu0 %v381
        %392 = vmatprep.subr.mxu0 0.0
        %393 = vmatpush1.msra.mxu0 %v382
        %394 = vmatprep.subr.mxu0 0.0
        %395 = vmatpush1.msra.mxu0 %v383
        %396 = vmatprep.subr.mxu0 0.0
        %397 = vmatpush1.msra.mxu0 0.0
        %398 = vmatprep.subr.mxu0 0.0
        %399 = vmatpush1.msra.mxu0 0.0
        %400 = vmatprep.subr.mxu0 0.0
        %401 = vmatpush1.msra.mxu0 0.0
        %402 = vmatprep.subr.mxu0 0.0
        %403 = vmatpush1.msra.mxu0 0.0
        %404 = vmatprep.subr.mxu0 0.0
        %405 = vmatpush1.msra.mxu0 0.0
        %406 = vmatprep.subr.mxu0 0.0
        %407 = vmatpush1.msra.mxu0 0.0
        %408 = vmatprep.subr.mxu0 0.0
        %409 = vmatpush1.msra.mxu0 0.0
        %410 = vmatprep.subr.mxu0 0.0
        %411 = vmatpush1.msra.mxu0 0.0
        %412 = vmatprep.subr.mxu0 0.0
        %413 = vmatpush1.msra.mxu0 0.0
        %414 = vmatprep.subr.mxu0 0.0
        %415 = vmatpush1.msra.mxu0 0.0
        %416 = vmatprep.subr.mxu0 0.0
        %417 = vmatpush1.msra.mxu0 0.0
        %418 = vmatprep.subr.mxu0 0.0
        %419 = vmatpush1.msra.mxu0 0.0
        %420 = vmatprep.subr.mxu0 0.0
        %421 = vmatpush1.msra.mxu0 0.0
        %422 = vmatprep.subr.mxu0 0.0
        %423 = vmatpush1.msra.mxu0 0.0
        %424 = vmatprep.subr.mxu0 0.0
        %425 = vmatpush1.msra.mxu0 0.0
        %426 = vmatprep.subr.mxu0 0.0
        %427 = vmatpush1.msra.mxu0 0.0
        %428 = vmatprep.subr.mxu0 0.0
        %429 = vmatpush1.msra.mxu0 0.0
        %430 = vmatprep.subr.mxu0 0.0
        %431 = vmatpush1.msra.mxu0 0.0
        %432 = vmatprep.subr.mxu0 0.0
        %433 = vmatpush1.msra.mxu0 0.0
        %434 = vmatprep.subr.mxu0 0.0
        %435 = vmatpush1.msra.mxu0 0.0
        %436 = vmatprep.subr.mxu0 0.0
        %437 = vmatpush1.msra.mxu0 0.0
        %438 = vmatprep.subr.mxu0 0.0
        %439 = vmatpush1.msra.mxu0 0.0
        %440 = vmatprep.subr.mxu0 0.0
        %441 = vmatpush1.msra.mxu0 0.0
        %442 = vmatprep.subr.mxu0 0.0
        %443 = vmatpush1.msra.mxu0 0.0
        %444 = vmatprep.subr.mxu0 0.0
        %445 = vmatpush1.msra.mxu0 0.0
        %446 = vmatprep.subr.mxu0 0.0
        %447 = vmatpush1.msra.mxu0 0.0
        %448 = vmatprep.subr.mxu0 0.0
        %449 = vmatpush1.msra.mxu0 0.0
        %450 = vmatprep.subr.mxu0 0.0
        %451 = vmatpush1.msra.mxu0 0.0
        %452 = vmatprep.mubr.f32.mxu0 0.0
        %453 = vmatmul.mubr.f32.gmra.mrb[0].mxu0 %v386
        %v454 = vpop.f32.mrb[0].mxu0
        %v455 = vadd.f32 0.0, %v454
        %v456 = vpop.f32.mrb[0].mxu0
        %457 = vdwg.mxu0
        %v458 = vld [vmem:[#allocation8] sm:$0xff]
        %v459 = vld [vmem:[#allocation8 + $0x8] sm:$0xff]
        %v460 = vld [vmem:[#allocation8 + $0x10] sm:$0xff]
        %v461 = vld [vmem:[#allocation8 + $0x18] sm:$0xff]
        %462 = vmatprep.subr.mxu0 0.0
        %463 = vmatpush1.msra.mxu0 %v458
        %464 = vmatprep.subr.mxu0 0.0
        %465 = vmatpush1.msra.mxu0 %v459
        %466 = vmatprep.subr.mxu0 0.0
        %467 = vmatpush1.msra.mxu0 %v460
        %468 = vmatprep.subr.mxu0 0.0
        %469 = vmatpush1.msra.mxu0 %v461
        %470 = vmatprep.subr.mxu0 0.0
        %471 = vmatpush1.msra.mxu0 0.0
        %472 = vmatprep.subr.mxu0 0.0
        %473 = vmatpush1.msra.mxu0 0.0
        %474 = vmatprep.subr.mxu0 0.0
        %475 = vmatpush1.msra.mxu0 0.0
        %476 = vmatprep.subr.mxu0 0.0
        %477 = vmatpush1.msra.mxu0 0.0
        %478 = vmatprep.subr.mxu0 0.0
        %479 = vmatpush1.msra.mxu0 0.0
        %480 = vmatprep.subr.mxu0 0.0
        %481 = vmatpush1.msra.mxu0 0.0
        %482 = vmatprep.subr.mxu0 0.0
        %483 = vmatpush1.msra.mxu0 0.0
        %484 = vmatprep.subr.mxu0 0.0
        %485 = vmatpush1.msra.mxu0 0.0
        %486 = vmatprep.subr.mxu0 0.0
        %487 = vmatpush1.msra.mxu0 0.0
        %488 = vmatprep.subr.mxu0 0.0
        %489 = vmatpush1.msra.mxu0 0.0
        %490 = vmatprep.subr.mxu0 0.0
        %491 = vmatpush1.msra.mxu0 0.0
        %492 = vmatprep.subr.mxu0 0.0
        %493 = vmatpush1.msra.mxu0 0.0
        %494 = vmatprep.subr.mxu0 0.0
        %495 = vmatpush1.msra.mxu0 0.0
        %496 = vmatprep.subr.mxu0 0.0
        %497 = vmatpush1.msra.mxu0 0.0
        %498 = vmatprep.subr.mxu0 0.0
        %499 = vmatpush1.msra.mxu0 0.0
        %500 = vmatprep.subr.mxu0 0.0
        %501 = vmatpush1.msra.mxu0 0.0
        %502 = vmatprep.subr.mxu0 0.0
        %503 = vmatpush1.msra.mxu0 0.0
        %504 = vmatprep.subr.mxu0 0.0
        %505 = vmatpush1.msra.mxu0 0.0
        %506 = vmatprep.subr.mxu0 0.0
        %507 = vmatpush1.msra.mxu0 0.0
        %508 = vmatprep.subr.mxu0 0.0
        %509 = vmatpush1.msra.mxu0 0.0
        %510 = vmatprep.subr.mxu0 0.0
        %511 = vmatpush1.msra.mxu0 0.0
        %512 = vmatprep.subr.mxu0 0.0
        %513 = vmatpush1.msra.mxu0 0.0
        %514 = vmatprep.subr.mxu0 0.0
        %515 = vmatpush1.msra.mxu0 0.0
        %516 = vmatprep.subr.mxu0 0.0
        %517 = vmatpush1.msra.mxu0 0.0
        %518 = vmatprep.subr.mxu0 0.0
        %519 = vmatpush1.msra.mxu0 0.0
        %520 = vmatprep.subr.mxu0 0.0
        %521 = vmatpush1.msra.mxu0 0.0
        %522 = vmatprep.subr.mxu0 0.0
        %523 = vmatpush1.msra.mxu0 0.0
        %524 = vmatprep.subr.mxu0 0.0
        %525 = vmatpush1.msra.mxu0 0.0
        %526 = vmatprep.mubr.f32.mxu0 0.0
        %527 = vmatmul.mubr.f32.gmra.mrb[0].mxu0 %v386
        %v528 = vpop.f32.mrb[0].mxu0
        %v529 = vadd.f32 0.0, %v528
        %v530 = vpop.f32.mrb[0].mxu0
        %531 = vdwg.mxu0
        %v532 = vld [vmem:[#allocation9] sm:$0xff]
        %v533 = vld [vmem:[#allocation9 + $0x8] sm:$0xff]
        %v534 = vld [vmem:[#allocation9 + $0x10] sm:$0xff]
        %v535 = vld [vmem:[#allocation9 + $0x18] sm:$0xff]
        %536 = vmatprep.subr.mxu0 0.0
        %537 = vmatpush1.msra.mxu0 %v532
        %538 = vmatprep.subr.mxu0 0.0
        %539 = vmatpush1.msra.mxu0 %v533
        %540 = vmatprep.subr.mxu0 0.0
        %541 = vmatpush1.msra.mxu0 %v534
        %542 = vmatprep.subr.mxu0 0.0
        %543 = vmatpush1.msra.mxu0 %v535
        %544 = vmatprep.subr.mxu0 0.0
        %545 = vmatpush1.msra.mxu0 0.0
        %546 = vmatprep.subr.mxu0 0.0
        %547 = vmatpush1.msra.mxu0 0.0
        %548 = vmatprep.subr.mxu0 0.0
        %549 = vmatpush1.msra.mxu0 0.0
        %550 = vmatprep.subr.mxu0 0.0
        %551 = vmatpush1.msra.mxu0 0.0
        %552 = vmatprep.subr.mxu0 0.0
        %553 = vmatpush1.msra.mxu0 0.0
        %554 = vmatprep.subr.mxu0 0.0
        %555 = vmatpush1.msra.mxu0 0.0
        %556 = vmatprep.subr.mxu0 0.0
        %557 = vmatpush1.msra.mxu0 0.0
        %558 = vmatprep.subr.mxu0 0.0
        %559 = vmatpush1.msra.mxu0 0.0
        %560 = vmatprep.subr.mxu0 0.0
        %561 = vmatpush1.msra.mxu0 0.0
        %562 = vmatprep.subr.mxu0 0.0
        %563 = vmatpush1.msra.mxu0 0.0
        %564 = vmatprep.subr.mxu0 0.0
        %565 = vmatpush1.msra.mxu0 0.0
        %566 = vmatprep.subr.mxu0 0.0
        %567 = vmatpush1.msra.mxu0 0.0
        %568 = vmatprep.subr.mxu0 0.0
        %569 = vmatpush1.msra.mxu0 0.0
        %570 = vmatprep.subr.mxu0 0.0
        %571 = vmatpush1.msra.mxu0 0.0
        %572 = vmatprep.subr.mxu0 0.0
        %573 = vmatpush1.msra.mxu0 0.0
        %574 = vmatprep.subr.mxu0 0.0
        %575 = vmatpush1.msra.mxu0 0.0
        %576 = vmatprep.subr.mxu0 0.0
        %577 = vmatpush1.msra.mxu0 0.0
        %578 = vmatprep.subr.mxu0 0.0
        %579 = vmatpush1.msra.mxu0 0.0
        %580 = vmatprep.subr.mxu0 0.0
        %581 = vmatpush1.msra.mxu0 0.0
        %582 = vmatprep.subr.mxu0 0.0
        %583 = vmatpush1.msra.mxu0 0.0
        %584 = vmatprep.subr.mxu0 0.0
        %585 = vmatpush1.msra.mxu0 0.0
        %586 = vmatprep.subr.mxu0 0.0
        %587 = vmatpush1.msra.mxu0 0.0
        %588 = vmatprep.subr.mxu0 0.0
        %589 = vmatpush1.msra.mxu0 0.0
        %590 = vmatprep.subr.mxu0 0.0
        %591 = vmatpush1.msra.mxu0 0.0
        %592 = vmatprep.subr.mxu0 0.0
        %593 = vmatpush1.msra.mxu0 0.0
        %594 = vmatprep.subr.mxu0 0.0
        %595 = vmatpush1.msra.mxu0 0.0
        %596 = vmatprep.subr.mxu0 0.0
        %597 = vmatpush1.msra.mxu0 0.0
        %598 = vmatprep.subr.mxu0 0.0
        %599 = vmatpush1.msra.mxu0 0.0
        %600 = vmatprep.mubr.f32.mxu0 0.0
        %601 = vmatmul.mubr.f32.gmra.mrb[0].mxu0 %v386
        %v602 = vpop.f32.mrb[0].mxu0
        %v603 = vadd.f32 0.0, %v602
        %v604 = vpop.f32.mrb[0].mxu0
        %605 = vdwg.mxu0
        %vm606 = vcmask 64512
        %v608 = vsel %vm606, %v455, 0
        %v611 = vsel %vm606, %v529, 0
        %613 = vmatprep.subr.mxu0 0.0
        %614 = vmatpush1.xpose.msra.mxu0 %v611
        %615 = vmatprep.subr.mxu0 0.0
        %616 = vmatpush1.xpose.msra.mxu0 0.0
        %617 = vmatprep.subr.mxu0 0.0
        %618 = vmatpush1.xpose.msra.mxu0 0.0
        %619 = vmatprep.subr.mxu0 0.0
        %620 = vmatpush1.xpose.msra.mxu0 0.0
        %621 = vmatprep.subr.mxu0 0.0
        %622 = vmatpush1.xpose.msra.mxu0 0.0
        %623 = vmatprep.subr.mxu0 0.0
        %624 = vmatpush1.xpose.msra.mxu0 0.0
        %625 = vmatprep.subr.mxu0 0.0
        %626 = vmatpush1.xpose.msra.mxu0 0.0
        %627 = vmatprep.subr.mxu0 0.0
        %628 = vmatpush1.xpose.msra.mxu0 0.0
        %629 = vmatprep.subr.mxu0 0.0
        %630 = vmatpush1.xpose.msra.mxu0 0.0
        %631 = vmatprep.subr.mxu0 0.0
        %632 = vmatpush1.xpose.msra.mxu0 0.0
        %633 = vmatprep.subr.mxu0 0.0
        %634 = vmatpush1.xpose.msra.mxu0 0.0
        %635 = vmatprep.subr.mxu0 0.0
        %636 = vmatpush1.xpose.msra.mxu0 0.0
        %637 = vmatprep.subr.mxu0 0.0
        %638 = vmatpush1.xpose.msra.mxu0 0.0
        %639 = vmatprep.subr.mxu0 0.0
        %640 = vmatpush1.xpose.msra.mxu0 0.0
        %641 = vmatprep.subr.mxu0 0.0
        %642 = vmatpush1.xpose.msra.mxu0 0.0
        %643 = vmatprep.subr.mxu0 0.0
        %644 = vmatpush1.xpose.msra.mxu0 0.0
        %645 = vmatprep.subr.mxu0 0.0
        %646 = vmatpush1.xpose.msra.mxu0 0.0
        %647 = vmatprep.subr.mxu0 0.0
        %648 = vmatpush1.xpose.msra.mxu0 0.0
        %649 = vmatprep.subr.mxu0 0.0
        %650 = vmatpush1.xpose.msra.mxu0 0.0
        %651 = vmatprep.subr.mxu0 0.0
        %652 = vmatpush1.xpose.msra.mxu0 0.0
        %653 = vmatprep.subr.mxu0 0.0
        %654 = vmatpush1.xpose.msra.mxu0 0.0
        %655 = vmatprep.subr.mxu0 0.0
        %656 = vmatpush1.xpose.msra.mxu0 0.0
        %657 = vmatprep.subr.mxu0 0.0
        %658 = vmatpush1.xpose.msra.mxu0 0.0
        %659 = vmatprep.subr.mxu0 0.0
        %660 = vmatpush1.xpose.msra.mxu0 0.0
        %661 = vmatprep.subr.mxu0 0.0
        %662 = vmatpush1.xpose.msra.mxu0 0.0
        %663 = vmatprep.subr.mxu0 0.0
        %664 = vmatpush1.xpose.msra.mxu0 0.0
        %665 = vmatprep.subr.mxu0 0.0
        %666 = vmatpush1.xpose.msra.mxu0 0.0
        %667 = vmatprep.subr.mxu0 0.0
        %668 = vmatpush1.xpose.msra.mxu0 0.0
        %669 = vmatprep.subr.mxu0 0.0
        %670 = vmatpush1.xpose.msra.mxu0 0.0
        %671 = vmatprep.subr.mxu0 0.0
        %672 = vmatpush1.xpose.msra.mxu0 0.0
        %673 = vmatprep.subr.mxu0 0.0
        %674 = vmatpush1.xpose.msra.mxu0 0.0
        %675 = vmatprep.subr.mxu0 0.0
        %676 = vmatpush1.xpose.msra.mxu0 0.0
        %677 = vmatprep.mubr.f32.mxu0 0.0
        %678 = vmatmul.mubr.f32.gmra.mrb[0].mxu0 %v608
        %v679 = vpop.f32.mrb[0].mxu0
        %v680 = vadd.f32 0.0, %v679
        %v681 = vpop.f32.mrb[0].mxu0
        %682 = vdwg.mxu0
        %v683 = vsel %vm606, %v680, -inf
        %684 = vmax.xlane.f32.xlu0 %v683
        %v685 = vpop.xlane.xlu0 %684
        %v686 = vsub.f32 %v680, %v685
        %v687 = vmul.f32 %v686, 1.442695
        %v688 = vpow.pop %v687
        %v689 = vsel %vm606, %v688, 0.0
        %690 = vadd.xlane.f32.xlu0 %v689
        %v691 = vpop.xlane.xlu0 %690
        %v693 = vsel %vm606, %v688, 0
        %695 = vmatprep.subr.mxu0 0.0
        %696 = vmatpush1.msra.mxu0 %v603
        %697 = vmatprep.subr.mxu0 0.0
        %698 = vmatpush1.msra.mxu0 0.0
        %699 = vmatprep.subr.mxu0 0.0
        %700 = vmatpush1.msra.mxu0 0.0
        %701 = vmatprep.subr.mxu0 0.0
        %702 = vmatpush1.msra.mxu0 0.0
        %703 = vmatprep.subr.mxu0 0.0
        %704 = vmatpush1.msra.mxu0 0.0
        %705 = vmatprep.subr.mxu0 0.0
        %706 = vmatpush1.msra.mxu0 0.0
        %707 = vmatprep.subr.mxu0 0.0
        %708 = vmatpush1.msra.mxu0 0.0
        %709 = vmatprep.subr.mxu0 0.0
        %710 = vmatpush1.msra.mxu0 0.0
        %711 = vmatprep.subr.mxu0 0.0
        %712 = vmatpush1.msra.mxu0 0.0
        %713 = vmatprep.subr.mxu0 0.0
        %714 = vmatpush1.msra.mxu0 0.0
        %715 = vmatprep.subr.mxu0 0.0
        %716 = vmatpush1.msra.mxu0 0.0
        %717 = vmatprep.subr.mxu0 0.0
        %718 = vmatpush1.msra.mxu0 0.0
        %719 = vmatprep.subr.mxu0 0.0
        %720 = vmatpush1.msra.mxu0 0.0
        %721 = vmatprep.subr.mxu0 0.0
        %722 = vmatpush1.msra.mxu0 0.0
        %723 = vmatprep.subr.mxu0 0.0
        %724 = vmatpush1.msra.mxu0 0.0
        %725 = vmatprep.subr.mxu0 0.0
        %726 = vmatpush1.msra.mxu0 0.0
        %727 = vmatprep.subr.mxu0 0.0
        %728 = vmatpush1.msra.mxu0 0.0
        %729 = vmatprep.subr.mxu0 0.0
        %730 = vmatpush1.msra.mxu0 0.0
        %731 = vmatprep.subr.mxu0 0.0
        %732 = vmatpush1.msra.mxu0 0.0
        %733 = vmatprep.subr.mxu0 0.0
        %734 = vmatpush1.msra.mxu0 0.0
        %735 = vmatprep.subr.mxu0 0.0
        %736 = vmatpush1.msra.mxu0 0.0
        %737 = vmatprep.subr.mxu0 0.0
        %738 = vmatpush1.msra.mxu0 0.0
        %739 = vmatprep.subr.mxu0 0.0
        %740 = vmatpush1.msra.mxu0 0.0
        %741 = vmatprep.subr.mxu0 0.0
        %742 = vmatpush1.msra.mxu0 0.0
        %743 = vmatprep.subr.mxu0 0.0
        %744 = vmatpush1.msra.mxu0 0.0
        %745 = vmatprep.subr.mxu0 0.0
        %746 = vmatpush1.msra.mxu0 0.0
        %747 = vmatprep.subr.mxu0 0.0
        %748 = vmatpush1.msra.mxu0 0.0
        %749 = vmatprep.subr.mxu0 0.0
        %750 = vmatpush1.msra.mxu0 0.0
        %751 = vmatprep.subr.mxu0 0.0
        %752 = vmatpush1.msra.mxu0 0.0
        %753 = vmatprep.subr.mxu0 0.0
        %754 = vmatpush1.msra.mxu0 0.0
        %755 = vmatprep.subr.mxu0 0.0
        %756 = vmatpush1.msra.mxu0 0.0
        %757 = vmatprep.subr.mxu0 0.0
        %758 = vmatpush1.msra.mxu0 0.0
        %759 = vmatprep.mubr.f32.mxu0 0.0
        %760 = vmatmul.mubr.f32.gmra.mrb[0].mxu0 %v693
        %v761 = vpop.f32.mrb[0].mxu0
        %v762 = vadd.f32 0.0, %v761
        %v763 = vpop.f32.mrb[0].mxu0
        %764 = vdwg.mxu0
        %v765 = vrcp.pop %v691
        %v766 = vmul.f32 %v762, %v765
        %767 = vst.msk [vmem:[#allocation2] sm:$0xff] %vm606, %v766
        %768 = vrot.lane.b32.xlu0 %v455, 120
        %v769 = vpop.permute.xlu0 %768
        %770 = vrot.lane.b32.xlu0 %v529, 120
        %v771 = vpop.permute.xlu0 %770
        %v772 = vsel %vm606, %v769, 0
        %v774 = vsel %vm606, %v771, 0
        %776 = vmatprep.subr.mxu0 0.0
        %777 = vmatpush1.xpose.msra.mxu0 %v774
        %778 = vmatprep.subr.mxu0 0.0
        %779 = vmatpush1.xpose.msra.mxu0 0.0
        %780 = vmatprep.subr.mxu0 0.0
        %781 = vmatpush1.xpose.msra.mxu0 0.0
        %782 = vmatprep.subr.mxu0 0.0
        %783 = vmatpush1.xpose.msra.mxu0 0.0
        %784 = vmatprep.subr.mxu0 0.0
        %785 = vmatpush1.xpose.msra.mxu0 0.0
        %786 = vmatprep.subr.mxu0 0.0
        %787 = vmatpush1.xpose.msra.mxu0 0.0
        %788 = vmatprep.subr.mxu0 0.0
        %789 = vmatpush1.xpose.msra.mxu0 0.0
        %790 = vmatprep.subr.mxu0 0.0
        %791 = vmatpush1.xpose.msra.mxu0 0.0
        %792 = vmatprep.subr.mxu0 0.0
        %793 = vmatpush1.xpose.msra.mxu0 0.0
        %794 = vmatprep.subr.mxu0 0.0
        %795 = vmatpush1.xpose.msra.mxu0 0.0
        %796 = vmatprep.subr.mxu0 0.0
        %797 = vmatpush1.xpose.msra.mxu0 0.0
        %798 = vmatprep.subr.mxu0 0.0
        %799 = vmatpush1.xpose.msra.mxu0 0.0
        %800 = vmatprep.subr.mxu0 0.0
        %801 = vmatpush1.xpose.msra.mxu0 0.0
        %802 = vmatprep.subr.mxu0 0.0
        %803 = vmatpush1.xpose.msra.mxu0 0.0
        %804 = vmatprep.subr.mxu0 0.0
        %805 = vmatpush1.xpose.msra.mxu0 0.0
        %806 = vmatprep.subr.mxu0 0.0
        %807 = vmatpush1.xpose.msra.mxu0 0.0
        %808 = vmatprep.subr.mxu0 0.0
        %809 = vmatpush1.xpose.msra.mxu0 0.0
        %810 = vmatprep.subr.mxu0 0.0
        %811 = vmatpush1.xpose.msra.mxu0 0.0
        %812 = vmatprep.subr.mxu0 0.0
        %813 = vmatpush1.xpose.msra.mxu0 0.0
        %814 = vmatprep.subr.mxu0 0.0
        %815 = vmatpush1.xpose.msra.mxu0 0.0
        %816 = vmatprep.subr.mxu0 0.0
        %817 = vmatpush1.xpose.msra.mxu0 0.0
        %818 = vmatprep.subr.mxu0 0.0
        %819 = vmatpush1.xpose.msra.mxu0 0.0
        %820 = vmatprep.subr.mxu0 0.0
        %821 = vmatpush1.xpose.msra.mxu0 0.0
        %822 = vmatprep.subr.mxu0 0.0
        %823 = vmatpush1.xpose.msra.mxu0 0.0
        %824 = vmatprep.subr.mxu0 0.0
        %825 = vmatpush1.xpose.msra.mxu0 0.0
        %826 = vmatprep.subr.mxu0 0.0
        %827 = vmatpush1.xpose.msra.mxu0 0.0
        %828 = vmatprep.subr.mxu0 0.0
        %829 = vmatpush1.xpose.msra.mxu0 0.0
        %830 = vmatprep.subr.mxu0 0.0
        %831 = vmatpush1.xpose.msra.mxu0 0.0
        %832 = vmatprep.subr.mxu0 0.0
        %833 = vmatpush1.xpose.msra.mxu0 0.0
        %834 = vmatprep.subr.mxu0 0.0
        %835 = vmatpush1.xpose.msra.mxu0 0.0
        %836 = vmatprep.subr.mxu0 0.0
        %837 = vmatpush1.xpose.msra.mxu0 0.0
        %838 = vmatprep.subr.mxu0 0.0
        %839 = vmatpush1.xpose.msra.mxu0 0.0
        %840 = vmatprep.mubr.f32.mxu0 0.0
        %841 = vmatmul.mubr.f32.gmra.mrb[0].mxu0 %v772
        %v842 = vpop.f32.mrb[0].mxu0
        %v843 = vadd.f32 0.0, %v842
        %v844 = vpop.f32.mrb[0].mxu0
        %845 = vdwg.mxu0
        %v846 = vsel %vm606, %v843, -inf
        %847 = vmax.xlane.f32.xlu0 %v846
        %v848 = vpop.xlane.xlu0 %847
        %v849 = vsub.f32 %v843, %v848
        %v850 = vmul.f32 %v849, 1.442695
        %v851 = vpow.pop %v850
        %v852 = vsel %vm606, %v851, 0.0
        %853 = vadd.xlane.f32.xlu0 %v852
        %v854 = vpop.xlane.xlu0 %853
        %856 = vrot.lane.b32.xlu0 %v603, 120
        %v857 = vpop.permute.xlu0 %856
        %v860 = vsel %vm606, %v851, 0
        %862 = vmatprep.subr.mxu0 0.0
        %863 = vmatpush1.msra.mxu0 %v857
        %864 = vmatprep.subr.mxu0 0.0
        %865 = vmatpush1.msra.mxu0 0.0
        %866 = vmatprep.subr.mxu0 0.0
        %867 = vmatpush1.msra.mxu0 0.0
        %868 = vmatprep.subr.mxu0 0.0
        %869 = vmatpush1.msra.mxu0 0.0
        %870 = vmatprep.subr.mxu0 0.0
        %871 = vmatpush1.msra.mxu0 0.0
        %872 = vmatprep.subr.mxu0 0.0
        %873 = vmatpush1.msra.mxu0 0.0
        %874 = vmatprep.subr.mxu0 0.0
        %875 = vmatpush1.msra.mxu0 0.0
        %876 = vmatprep.subr.mxu0 0.0
        %877 = vmatpush1.msra.mxu0 0.0
        %878 = vmatprep.subr.mxu0 0.0
        %879 = vmatpush1.msra.mxu0 0.0
        %880 = vmatprep.subr.mxu0 0.0
        %881 = vmatpush1.msra.mxu0 0.0
        %882 = vmatprep.subr.mxu0 0.0
        %883 = vmatpush1.msra.mxu0 0.0
        %884 = vmatprep.subr.mxu0 0.0
        %885 = vmatpush1.msra.mxu0 0.0
        %886 = vmatprep.subr.mxu0 0.0
        %887 = vmatpush1.msra.mxu0 0.0
        %888 = vmatprep.subr.mxu0 0.0
        %889 = vmatpush1.msra.mxu0 0.0
        %890 = vmatprep.subr.mxu0 0.0
        %891 = vmatpush1.msra.mxu0 0.0
        %892 = vmatprep.subr.mxu0 0.0
        %893 = vmatpush1.msra.mxu0 0.0
        %894 = vmatprep.subr.mxu0 0.0
        %895 = vmatpush1.msra.mxu0 0.0
        %896 = vmatprep.subr.mxu0 0.0
        %897 = vmatpush1.msra.mxu0 0.0
        %898 = vmatprep.subr.mxu0 0.0
        %899 = vmatpush1.msra.mxu0 0.0
        %900 = vmatprep.subr.mxu0 0.0
        %901 = vmatpush1.msra.mxu0 0.0
        %902 = vmatprep.subr.mxu0 0.0
        %903 = vmatpush1.msra.mxu0 0.0
        %904 = vmatprep.subr.mxu0 0.0
        %905 = vmatpush1.msra.mxu0 0.0
        %906 = vmatprep.subr.mxu0 0.0
        %907 = vmatpush1.msra.mxu0 0.0
        %908 = vmatprep.subr.mxu0 0.0
        %909 = vmatpush1.msra.mxu0 0.0
        %910 = vmatprep.subr.mxu0 0.0
        %911 = vmatpush1.msra.mxu0 0.0
        %912 = vmatprep.subr.mxu0 0.0
        %913 = vmatpush1.msra.mxu0 0.0
        %914 = vmatprep.subr.mxu0 0.0
        %915 = vmatpush1.msra.mxu0 0.0
        %916 = vmatprep.subr.mxu0 0.0
        %917 = vmatpush1.msra.mxu0 0.0
        %918 = vmatprep.subr.mxu0 0.0
        %919 = vmatpush1.msra.mxu0 0.0
        %920 = vmatprep.subr.mxu0 0.0
        %921 = vmatpush1.msra.mxu0 0.0
        %922 = vmatprep.subr.mxu0 0.0
        %923 = vmatpush1.msra.mxu0 0.0
        %924 = vmatprep.subr.mxu0 0.0
        %925 = vmatpush1.msra.mxu0 0.0
        %926 = vmatprep.mubr.f32.mxu0 0.0
        %927 = vmatmul.mubr.f32.gmra.mrb[0].mxu0 %v860
        %v928 = vpop.f32.mrb[0].mxu0
        %v929 = vadd.f32 0.0, %v928
        %v930 = vpop.f32.mrb[0].mxu0
        %931 = vdwg.mxu0
        %v932 = vrcp.pop %v854
        %v933 = vmul.f32 %v929, %v932
        %935 = vrot.lane.b32.xlu0 %v933, 8
        %v936 = vpop.permute.xlu0 %935
        %vm938 = vcmask 130112
        %939 = vst.msk [vmem:[#allocation2] sm:$0xff] %vm938, %v936
        %940 = vrot.lane.b32.xlu0 %v455, 112
        %v941 = vpop.permute.xlu0 %940
        %942 = vrot.lane.b32.xlu0 %v529, 112
        %v943 = vpop.permute.xlu0 %942
        %v944 = vsel %vm606, %v941, 0
        %v946 = vsel %vm606, %v943, 0
        %948 = vmatprep.subr.mxu0 0.0
        %949 = vmatpush1.xpose.msra.mxu0 %v946
        %950 = vmatprep.subr.mxu0 0.0
        %951 = vmatpush1.xpose.msra.mxu0 0.0
        %952 = vmatprep.subr.mxu0 0.0
        %953 = vmatpush1.xpose.msra.mxu0 0.0
        %954 = vmatprep.subr.mxu0 0.0
        %955 = vmatpush1.xpose.msra.mxu0 0.0
        %956 = vmatprep.subr.mxu0 0.0
        %957 = vmatpush1.xpose.msra.mxu0 0.0
        %958 = vmatprep.subr.mxu0 0.0
        %959 = vmatpush1.xpose.msra.mxu0 0.0
        %960 = vmatprep.subr.mxu0 0.0
        %961 = vmatpush1.xpose.msra.mxu0 0.0
        %962 = vmatprep.subr.mxu0 0.0
        %963 = vmatpush1.xpose.msra.mxu0 0.0
        %964 = vmatprep.subr.mxu0 0.0
        %965 = vmatpush1.xpose.msra.mxu0 0.0
        %966 = vmatprep.subr.mxu0 0.0
        %967 = vmatpush1.xpose.msra.mxu0 0.0
        %968 = vmatprep.subr.mxu0 0.0
        %969 = vmatpush1.xpose.msra.mxu0 0.0
        %970 = vmatprep.subr.mxu0 0.0
        %971 = vmatpush1.xpose.msra.mxu0 0.0
        %972 = vmatprep.subr.mxu0 0.0
        %973 = vmatpush1.xpose.msra.mxu0 0.0
        %974 = vmatprep.subr.mxu0 0.0
        %975 = vmatpush1.xpose.msra.mxu0 0.0
        %976 = vmatprep.subr.mxu0 0.0
        %977 = vmatpush1.xpose.msra.mxu0 0.0
        %978 = vmatprep.subr.mxu0 0.0
        %979 = vmatpush1.xpose.msra.mxu0 0.0
        %980 = vmatprep.subr.mxu0 0.0
        %981 = vmatpush1.xpose.msra.mxu0 0.0
        %982 = vmatprep.subr.mxu0 0.0
        %983 = vmatpush1.xpose.msra.mxu0 0.0
        %984 = vmatprep.subr.mxu0 0.0
        %985 = vmatpush1.xpose.msra.mxu0 0.0
        %986 = vmatprep.subr.mxu0 0.0
        %987 = vmatpush1.xpose.msra.mxu0 0.0
        %988 = vmatprep.subr.mxu0 0.0
        %989 = vmatpush1.xpose.msra.mxu0 0.0
        %990 = vmatprep.subr.mxu0 0.0
        %991 = vmatpush1.xpose.msra.mxu0 0.0
        %992 = vmatprep.subr.mxu0 0.0
        %993 = vmatpush1.xpose.msra.mxu0 0.0
        %994 = vmatprep.subr.mxu0 0.0
        %995 = vmatpush1.xpose.msra.mxu0 0.0
        %996 = vmatprep.subr.mxu0 0.0
        %997 = vmatpush1.xpose.msra.mxu0 0.0
        %998 = vmatprep.subr.mxu0 0.0
        %999 = vmatpush1.xpose.msra.mxu0 0.0
        %1000 = vmatprep.subr.mxu0 0.0
        %1001 = vmatpush1.xpose.msra.mxu0 0.0
        %1002 = vmatprep.subr.mxu0 0.0
        %1003 = vmatpush1.xpose.msra.mxu0 0.0
        %1004 = vmatprep.subr.mxu0 0.0
        %1005 = vmatpush1.xpose.msra.mxu0 0.0
        %1006 = vmatprep.subr.mxu0 0.0
        %1007 = vmatpush1.xpose.msra.mxu0 0.0
        %1008 = vmatprep.subr.mxu0 0.0
        %1009 = vmatpush1.xpose.msra.mxu0 0.0
        %1010 = vmatprep.subr.mxu0 0.0
        %1011 = vmatpush1.xpose.msra.mxu0 0.0
        %1012 = vmatprep.mubr.f32.mxu0 0.0
        %1013 = vmatmul.mubr.f32.gmra.mrb[0].mxu0 %v944
        %v1014 = vpop.f32.mrb[0].mxu0
        %v1015 = vadd.f32 0.0, %v1014
        %v1016 = vpop.f32.mrb[0].mxu0
        %1017 = vdwg.mxu0
        %v1018 = vsel %vm606, %v1015, -inf
        %1019 = vmax.xlane.f32.xlu0 %v1018
        %v1020 = vpop.xlane.xlu0 %1019
        %v1021 = vsub.f32 %v1015, %v1020
        %v1022 = vmul.f32 %v1021, 1.442695
        %v1023 = vpow.pop %v1022
        %v1024 = vsel %vm606, %v1023, 0.0
        %1025 = vadd.xlane.f32.xlu0 %v1024
        %v1026 = vpop.xlane.xlu0 %1025
        %1027 = vrot.lane.b32.xlu0 %v603, 112
        %v1028 = vpop.permute.xlu0 %1027
        %v1031 = vsel %vm606, %v1023, 0
        %1033 = vmatprep.subr.mxu0 0.0
        %1034 = vmatpush1.msra.mxu0 %v1028
        %1035 = vmatprep.subr.mxu0 0.0
        %1036 = vmatpush1.msra.mxu0 0.0
        %1037 = vmatprep.subr.mxu0 0.0
        %1038 = vmatpush1.msra.mxu0 0.0
        %1039 = vmatprep.subr.mxu0 0.0
        %1040 = vmatpush1.msra.mxu0 0.0
        %1041 = vmatprep.subr.mxu0 0.0
        %1042 = vmatpush1.msra.mxu0 0.0
        %1043 = vmatprep.subr.mxu0 0.0
        %1044 = vmatpush1.msra.mxu0 0.0
        %1045 = vmatprep.subr.mxu0 0.0
        %1046 = vmatpush1.msra.mxu0 0.0
        %1047 = vmatprep.subr.mxu0 0.0
        %1048 = vmatpush1.msra.mxu0 0.0
        %1049 = vmatprep.subr.mxu0 0.0
        %1050 = vmatpush1.msra.mxu0 0.0
        %1051 = vmatprep.subr.mxu0 0.0
        %1052 = vmatpush1.msra.mxu0 0.0
        %1053 = vmatprep.subr.mxu0 0.0
        %1054 = vmatpush1.msra.mxu0 0.0
        %1055 = vmatprep.subr.mxu0 0.0
        %1056 = vmatpush1.msra.mxu0 0.0
        %1057 = vmatprep.subr.mxu0 0.0
        %1058 = vmatpush1.msra.mxu0 0.0
        %1059 = vmatprep.subr.mxu0 0.0
        %1060 = vmatpush1.msra.mxu0 0.0
        %1061 = vmatprep.subr.mxu0 0.0
        %1062 = vmatpush1.msra.mxu0 0.0
        %1063 = vmatprep.subr.mxu0 0.0
        %1064 = vmatpush1.msra.mxu0 0.0
        %1065 = vmatprep.subr.mxu0 0.0
        %1066 = vmatpush1.msra.mxu0 0.0
        %1067 = vmatprep.subr.mxu0 0.0
        %1068 = vmatpush1.msra.mxu0 0.0
        %1069 = vmatprep.subr.mxu0 0.0
        %1070 = vmatpush1.msra.mxu0 0.0
        %1071 = vmatprep.subr.mxu0 0.0
        %1072 = vmatpush1.msra.mxu0 0.0
        %1073 = vmatprep.subr.mxu0 0.0
        %1074 = vmatpush1.msra.mxu0 0.0
        %1075 = vmatprep.subr.mxu0 0.0
        %1076 = vmatpush1.msra.mxu0 0.0
        %1077 = vmatprep.subr.mxu0 0.0
        %1078 = vmatpush1.msra.mxu0 0.0
        %1079 = vmatprep.subr.mxu0 0.0
        %1080 = vmatpush1.msra.mxu0 0.0
        %1081 = vmatprep.subr.mxu0 0.0
        %1082 = vmatpush1.msra.mxu0 0.0
        %1083 = vmatprep.subr.mxu0 0.0
        %1084 = vmatpush1.msra.mxu0 0.0
        %1085 = vmatprep.subr.mxu0 0.0
        %1086 = vmatpush1.msra.mxu0 0.0
        %1087 = vmatprep.subr.mxu0 0.0
        %1088 = vmatpush1.msra.mxu0 0.0
        %1089 = vmatprep.subr.mxu0 0.0
        %1090 = vmatpush1.msra.mxu0 0.0
        %1091 = vmatprep.subr.mxu0 0.0
        %1092 = vmatpush1.msra.mxu0 0.0
        %1093 = vmatprep.subr.mxu0 0.0
        %1094 = vmatpush1.msra.mxu0 0.0
        %1095 = vmatprep.subr.mxu0 0.0
        %1096 = vmatpush1.msra.mxu0 0.0
        %1097 = vmatprep.mubr.f32.mxu0 0.0
        %1098 = vmatmul.mubr.f32.gmra.mrb[0].mxu0 %v1031
        %v1099 = vpop.f32.mrb[0].mxu0
        %v1100 = vadd.f32 0.0, %v1099
        %v1101 = vpop.f32.mrb[0].mxu0
        %1102 = vdwg.mxu0
        %v1103 = vrcp.pop %v1026
        %v1104 = vmul.f32 %v1100, %v1103
        %1106 = vrot.lane.b32.xlu0 %v1104, 16
        %v1107 = vpop.permute.xlu0 %1106
        %vm1109 = vcmask 195712
        %1110 = vst.msk [vmem:[#allocation2] sm:$0xff] %vm1109, %v1107
        %1111 = vrot.lane.b32.xlu0 %v455, 104
        %v1112 = vpop.permute.xlu0 %1111
        %1113 = vrot.lane.b32.xlu0 %v529, 104
        %v1114 = vpop.permute.xlu0 %1113
        %v1115 = vsel %vm606, %v1112, 0
        %v1117 = vsel %vm606, %v1114, 0
        %1119 = vmatprep.subr.mxu0 0.0
        %1120 = vmatpush1.xpose.msra.mxu0 %v1117
        %1121 = vmatprep.subr.mxu0 0.0
        %1122 = vmatpush1.xpose.msra.mxu0 0.0
        %1123 = vmatprep.subr.mxu0 0.0
        %1124 = vmatpush1.xpose.msra.mxu0 0.0
        %1125 = vmatprep.subr.mxu0 0.0
        %1126 = vmatpush1.xpose.msra.mxu0 0.0
        %1127 = vmatprep.subr.mxu0 0.0
        %1128 = vmatpush1.xpose.msra.mxu0 0.0
        %1129 = vmatprep.subr.mxu0 0.0
        %1130 = vmatpush1.xpose.msra.mxu0 0.0
        %1131 = vmatprep.subr.mxu0 0.0
        %1132 = vmatpush1.xpose.msra.mxu0 0.0
        %1133 = vmatprep.subr.mxu0 0.0
        %1134 = vmatpush1.xpose.msra.mxu0 0.0
        %1135 = vmatprep.subr.mxu0 0.0
        %1136 = vmatpush1.xpose.msra.mxu0 0.0
        %1137 = vmatprep.subr.mxu0 0.0
        %1138 = vmatpush1.xpose.msra.mxu0 0.0
        %1139 = vmatprep.subr.mxu0 0.0
        %1140 = vmatpush1.xpose.msra.mxu0 0.0
        %1141 = vmatprep.subr.mxu0 0.0
        %1142 = vmatpush1.xpose.msra.mxu0 0.0
        %1143 = vmatprep.subr.mxu0 0.0
        %1144 = vmatpush1.xpose.msra.mxu0 0.0
        %1145 = vmatprep.subr.mxu0 0.0
        %1146 = vmatpush1.xpose.msra.mxu0 0.0
        %1147 = vmatprep.subr.mxu0 0.0
        %1148 = vmatpush1.xpose.msra.mxu0 0.0
        %1149 = vmatprep.subr.mxu0 0.0
        %1150 = vmatpush1.xpose.msra.mxu0 0.0
        %1151 = vmatprep.subr.mxu0 0.0
        %1152 = vmatpush1.xpose.msra.mxu0 0.0
        %1153 = vmatprep.subr.mxu0 0.0
        %1154 = vmatpush1.xpose.msra.mxu0 0.0
        %1155 = vmatprep.subr.mxu0 0.0
        %1156 = vmatpush1.xpose.msra.mxu0 0.0
        %1157 = vmatprep.subr.mxu0 0.0
        %1158 = vmatpush1.xpose.msra.mxu0 0.0
        %1159 = vmatprep.subr.mxu0 0.0
        %1160 = vmatpush1.xpose.msra.mxu0 0.0
        %1161 = vmatprep.subr.mxu0 0.0
        %1162 = vmatpush1.xpose.msra.mxu0 0.0
        %1163 = vmatprep.subr.mxu0 0.0
        %1164 = vmatpush1.xpose.msra.mxu0 0.0
        %1165 = vmatprep.subr.mxu0 0.0
        %1166 = vmatpush1.xpose.msra.mxu0 0.0
        %1167 = vmatprep.subr.mxu0 0.0
        %1168 = vmatpush1.xpose.msra.mxu0 0.0
        %1169 = vmatprep.subr.mxu0 0.0
        %1170 = vmatpush1.xpose.msra.mxu0 0.0
        %1171 = vmatprep.subr.mxu0 0.0
        %1172 = vmatpush1.xpose.msra.mxu0 0.0
        %1173 = vmatprep.subr.mxu0 0.0
        %1174 = vmatpush1.xpose.msra.mxu0 0.0
        %1175 = vmatprep.subr.mxu0 0.0
        %1176 = vmatpush1.xpose.msra.mxu0 0.0
        %1177 = vmatprep.subr.mxu0 0.0
        %1178 = vmatpush1.xpose.msra.mxu0 0.0
        %1179 = vmatprep.subr.mxu0 0.0
        %1180 = vmatpush1.xpose.msra.mxu0 0.0
        %1181 = vmatprep.subr.mxu0 0.0
        %1182 = vmatpush1.xpose.msra.mxu0 0.0
        %1183 = vmatprep.mubr.f32.mxu0 0.0
        %1184 = vmatmul.mubr.f32.gmra.mrb[0].mxu0 %v1115
        %v1185 = vpop.f32.mrb[0].mxu0
        %v1186 = vadd.f32 0.0, %v1185
        %v1187 = vpop.f32.mrb[0].mxu0
        %1188 = vdwg.mxu0
        %v1189 = vsel %vm606, %v1186, -inf
        %1190 = vmax.xlane.f32.xlu0 %v1189
        %v1191 = vpop.xlane.xlu0 %1190
        %v1192 = vsub.f32 %v1186, %v1191
        %v1193 = vmul.f32 %v1192, 1.442695
        %v1194 = vpow.pop %v1193
        %v1195 = vsel %vm606, %v1194, 0.0
        %1196 = vadd.xlane.f32.xlu0 %v1195
        %v1197 = vpop.xlane.xlu0 %1196
        %1198 = vrot.lane.b32.xlu0 %v603, 104
        %v1199 = vpop.permute.xlu0 %1198
        %v1202 = vsel %vm606, %v1194, 0
        %1204 = vmatprep.subr.mxu0 0.0
        %1205 = vmatpush1.msra.mxu0 %v1199
        %1206 = vmatprep.subr.mxu0 0.0
        %1207 = vmatpush1.msra.mxu0 0.0
        %1208 = vmatprep.subr.mxu0 0.0
        %1209 = vmatpush1.msra.mxu0 0.0
        %1210 = vmatprep.subr.mxu0 0.0
        %1211 = vmatpush1.msra.mxu0 0.0
        %1212 = vmatprep.subr.mxu0 0.0
        %1213 = vmatpush1.msra.mxu0 0.0
        %1214 = vmatprep.subr.mxu0 0.0
        %1215 = vmatpush1.msra.mxu0 0.0
        %1216 = vmatprep.subr.mxu0 0.0
        %1217 = vmatpush1.msra.mxu0 0.0
        %1218 = vmatprep.subr.mxu0 0.0
        %1219 = vmatpush1.msra.mxu0 0.0
        %1220 = vmatprep.subr.mxu0 0.0
        %1221 = vmatpush1.msra.mxu0 0.0
        %1222 = vmatprep.subr.mxu0 0.0
        %1223 = vmatpush1.msra.mxu0 0.0
        %1224 = vmatprep.subr.mxu0 0.0
        %1225 = vmatpush1.msra.mxu0 0.0
        %1226 = vmatprep.subr.mxu0 0.0
        %1227 = vmatpush1.msra.mxu0 0.0
        %1228 = vmatprep.subr.mxu0 0.0
        %1229 = vmatpush1.msra.mxu0 0.0
        %1230 = vmatprep.subr.mxu0 0.0
        %1231 = vmatpush1.msra.mxu0 0.0
        %1232 = vmatprep.subr.mxu0 0.0
        %1233 = vmatpush1.msra.mxu0 0.0
        %1234 = vmatprep.subr.mxu0 0.0
        %1235 = vmatpush1.msra.mxu0 0.0
        %1236 = vmatprep.subr.mxu0 0.0
        %1237 = vmatpush1.msra.mxu0 0.0
        %1238 = vmatprep.subr.mxu0 0.0
        %1239 = vmatpush1.msra.mxu0 0.0
        %1240 = vmatprep.subr.mxu0 0.0
        %1241 = vmatpush1.msra.mxu0 0.0
        %1242 = vmatprep.subr.mxu0 0.0
        %1243 = vmatpush1.msra.mxu0 0.0
        %1244 = vmatprep.subr.mxu0 0.0
        %1245 = vmatpush1.msra.mxu0 0.0
        %1246 = vmatprep.subr.mxu0 0.0
        %1247 = vmatpush1.msra.mxu0 0.0
        %1248 = vmatprep.subr.mxu0 0.0
        %1249 = vmatpush1.msra.mxu0 0.0
        %1250 = vmatprep.subr.mxu0 0.0
        %1251 = vmatpush1.msra.mxu0 0.0
        %1252 = vmatprep.subr.mxu0 0.0
        %1253 = vmatpush1.msra.mxu0 0.0
        %1254 = vmatprep.subr.mxu0 0.0
        %1255 = vmatpush1.msra.mxu0 0.0
        %1256 = vmatprep.subr.mxu0 0.0
        %1257 = vmatpush1.msra.mxu0 0.0
        %1258 = vmatprep.subr.mxu0 0.0
        %1259 = vmatpush1.msra.mxu0 0.0
        %1260 = vmatprep.subr.mxu0 0.0
        %1261 = vmatpush1.msra.mxu0 0.0
        %1262 = vmatprep.subr.mxu0 0.0
        %1263 = vmatpush1.msra.mxu0 0.0
        %1264 = vmatprep.subr.mxu0 0.0
        %1265 = vmatpush1.msra.mxu0 0.0
        %1266 = vmatprep.subr.mxu0 0.0
        %1267 = vmatpush1.msra.mxu0 0.0
        %1268 = vmatprep.mubr.f32.mxu0 0.0
        %1269 = vmatmul.mubr.f32.gmra.mrb[0].mxu0 %v1202
        %v1270 = vpop.f32.mrb[0].mxu0
        %v1271 = vadd.f32 0.0, %v1270
        %v1272 = vpop.f32.mrb[0].mxu0
        %1273 = vdwg.mxu0
        %v1274 = vrcp.pop %v1197
        %v1275 = vmul.f32 %v1271, %v1274
        %1277 = vrot.lane.b32.xlu0 %v1275, 24
        %v1278 = vpop.permute.xlu0 %1277
        %vm1280 = vcmask 261312
        %1281 = vst.msk [vmem:[#allocation2] sm:$0xff] %vm1280, %v1278
        %v1282 = vld [vmem:[#allocation2] sm:$0xff]
        %v1283 = vld [vmem:[#allocation11] sm:$0xff]
        %v1284 = vld [vmem:[#allocation11 + $0x8] sm:$0xff]
        %v1285 = vld [vmem:[#allocation11 + $0x10] sm:$0xff]
        %v1286 = vld [vmem:[#allocation11 + $0x18] sm:$0xff]
        %v1287 = vld [vmem:[%s7] sm:$0x1]
        %v1289 = vlaneseq
        %v1290 = vshrl.u32 %v1289, 7
        %v1291 = vsub.s32 0, %v1290
        %v1292 = vrot.slane %v1287, %v1291
        %v1295 = vsel %vm384, %v1282, 0
        %1297 = vmatprep.subr.mxu0 0.0
        %1298 = vmatpush1.msra.mxu0 %v1283
        %1299 = vmatprep.subr.mxu0 0.0
        %1300 = vmatpush1.msra.mxu0 %v1284
        %1301 = vmatprep.subr.mxu0 0.0
        %1302 = vmatpush1.msra.mxu0 %v1285
        %1303 = vmatprep.subr.mxu0 0.0
        %1304 = vmatpush1.msra.mxu0 %v1286
        %1305 = vmatprep.subr.mxu0 0.0
        %1306 = vmatpush1.msra.mxu0 0.0
        %1307 = vmatprep.subr.mxu0 0.0
        %1308 = vmatpush1.msra.mxu0 0.0
        %1309 = vmatprep.subr.mxu0 0.0
        %1310 = vmatpush1.msra.mxu0 0.0
        %1311 = vmatprep.subr.mxu0 0.0
        %1312 = vmatpush1.msra.mxu0 0.0
        %1313 = vmatprep.subr.mxu0 0.0
        %1314 = vmatpush1.msra.mxu0 0.0
        %1315 = vmatprep.subr.mxu0 0.0
        %1316 = vmatpush1.msra.mxu0 0.0
        %1317 = vmatprep.subr.mxu0 0.0
        %1318 = vmatpush1.msra.mxu0 0.0
        %1319 = vmatprep.subr.mxu0 0.0
        %1320 = vmatpush1.msra.mxu0 0.0
        %1321 = vmatprep.subr.mxu0 0.0
        %1322 = vmatpush1.msra.mxu0 0.0
        %1323 = vmatprep.subr.mxu0 0.0
        %1324 = vmatpush1.msra.mxu0 0.0
        %1325 = vmatprep.subr.mxu0 0.0
        %1326 = vmatpush1.msra.mxu0 0.0
        %1327 = vmatprep.subr.mxu0 0.0
        %1328 = vmatpush1.msra.mxu0 0.0
        %1329 = vmatprep.subr.mxu0 0.0
        %1330 = vmatpush1.msra.mxu0 0.0
        %1331 = vmatprep.subr.mxu0 0.0
        %1332 = vmatpush1.msra.mxu0 0.0
        %1333 = vmatprep.subr.mxu0 0.0
        %1334 = vmatpush1.msra.mxu0 0.0
        %1335 = vmatprep.subr.mxu0 0.0
        %1336 = vmatpush1.msra.mxu0 0.0
        %1337 = vmatprep.subr.mxu0 0.0
        %1338 = vmatpush1.msra.mxu0 0.0
        %1339 = vmatprep.subr.mxu0 0.0
        %1340 = vmatpush1.msra.mxu0 0.0
        %1341 = vmatprep.subr.mxu0 0.0
        %1342 = vmatpush1.msra.mxu0 0.0
        %1343 = vmatprep.subr.mxu0 0.0
        %1344 = vmatpush1.msra.mxu0 0.0
        %1345 = vmatprep.subr.mxu0 0.0
        %1346 = vmatpush1.msra.mxu0 0.0
        %1347 = vmatprep.subr.mxu0 0.0
        %1348 = vmatpush1.msra.mxu0 0.0
        %1349 = vmatprep.subr.mxu0 0.0
        %1350 = vmatpush1.msra.mxu0 0.0
        %1351 = vmatprep.subr.mxu0 0.0
        %1352 = vmatpush1.msra.mxu0 0.0
        %1353 = vmatprep.subr.mxu0 0.0
        %1354 = vmatpush1.msra.mxu0 0.0
        %1355 = vmatprep.subr.mxu0 0.0
        %1356 = vmatpush1.msra.mxu0 0.0
        %1357 = vmatprep.subr.mxu0 0.0
        %1358 = vmatpush1.msra.mxu0 0.0
        %1359 = vmatprep.subr.mxu0 0.0
        %1360 = vmatpush1.msra.mxu0 0.0
        %1361 = vmatprep.mubr.f32.mxu0 0.0
        %1362 = vmatmul.mubr.f32.gmra.mrb[0].mxu0 %v1295
        %v1363 = vpop.f32.mrb[0].mxu0
        %v1364 = vadd.f32 %v1292, %v1363
        %v1365 = vpop.f32.mrb[0].mxu0
        %1366 = vdwg.mxu0
        %1367 = vst.msk [vmem:[%s378] sm:$0xff] %vm384, %v1364
        %s1368 = sand.u32 %s208, 1
        %s1369 = scalar_lea.sflag [#allocation5], %s1368
        %s1370 = sand.u32 %s208, 1
        %s1371 = smul.addr %s1370, 8
        %s1372 = scalar_lea.vmem [#allocation12], %s1371
        // Predicated region
        $region73: #{tpu_custom_call.1} parent=51 // pred_check
          %p1373 = pneg %p218
        $region74: #{tpu_custom_call.1} parent=51 // pred_check_branch
          %1375 = sbr.rel (%p1373) target = $region76
        $region75: #{tpu_custom_call.1} parent=51 // pred_region
          %s1377 = ssub.s32 128, 128
          %1378 = vsyncadd %s1369, %s1377
          %s1379 = smul.addr %s27, 128
          %s1380 = scalar_lea.hbm %s8, %s1379
          %s1382 = sshll.u32 %s1372, 4
          %s1383 = int_to_ptr.vmem [resolvable:$true] %s1382
          %1385 = dma.vmem_to_hbm [thread:$0]  %s1383, 128, %s1380, %s1369
        $region76: #{tpu_custom_call.1} parent=51 // pred_fallthru
          _
      $region52: #{tpu_custom_call.1} parent=5 // pred_fallthru
        _
      %p1386 = scmp.le.s32.totalorder 2, %s22
      // Predicated region
      $region77: #{tpu_custom_call.1} parent=5 // pred_check
        %p1387 = pneg %p1386
      $region78: #{tpu_custom_call.1} parent=5 // pred_check_branch
        %1389 = sbr.rel (%p1387) target = $region80
      $region79: #{tpu_custom_call.1} parent=5 // pred_region
        %s1390 = ssub.s32 %s22, 2
        // Predicated region
        $region81: #{tpu_custom_call.1} parent=79 // pred_check
          %p1391 = pneg %p224
        $region82: #{tpu_custom_call.1} parent=79 // pred_check_branch
          %1393 = sbr.rel (%p1391) target = $region84
        $region83: #{tpu_custom_call.1} parent=79 // pred_region
          %s1394 = sand.u32 %s209, 1
          %s1395 = scalar_lea.sflag [#allocation5], %s1394
          %s1396 = sand.u32 %s209, 1
          %s1397 = smul.addr %s1396, 8
          %s1398 = scalar_lea.vmem [#allocation12], %s1397
          %1399 = dma.done %s1395, 128
        $region84: #{tpu_custom_call.1} parent=79 // pred_fallthru
          _
      $region80: #{tpu_custom_call.1} parent=5 // pred_fallthru
        _
    $region6: #{tpu_custom_call.1} parent=1 // loop_footer
      %s26 = sadd.s32 1, %s22
    $region7: #{tpu_custom_call.1} parent=1 // loop_footer_branch
      %21 = sbr.rel target = $region3
    $region8: #{tpu_custom_call.1} parent=1 // loop_exit
      _
    %1400 = vsyncpa [#allocation4], 1
    %s1401 = scalar_lea.sflag [#allocation4], 1
    %1402 = vsyncpa %s1401, 1
    %1403 = vsyncpa [#allocation7], 1
    %1404 = vsyncpa [#allocation10], 1
    %1405 = vsyncpa [#allocation5], 1
    %s1406 = scalar_lea.sflag [#allocation5], 1
    %1407 = vsyncpa %s1406, 1

</llo_original>
